<compile_context>
chip_gen: v7x
topology: tpu7x:2x2x1
jax: 0.10.0
libtpu: 0.0.40
codegen_flags: <defaults>
</compile_context>

<pallas_src>
import numpy as np
import jax
import jax.numpy as jnp
from jax.experimental import pallas as pl
from jax.experimental.pallas import tpu as pltpu

F = 32                    # n_feature_maps
KS = [41, 21, 11]         # kernel_size=41 -> kernerl_size=40 -> [40 // 2**i + 1]
PADS = [20, 10, 5]        # (k - 1) // 2
PMAX = 20                 # max padding -> left zero-pad width inside each example window
T = KS[0]                 # 41 taps on the common grid
BOTTLENECK = 32
BN_EPS = 1e-5
TAIL = 128                # extra zero lanes at the end of the VMEM slab (>= 2*PMAX)


def _make_kernel(use_pre, B, L, Lp, W, Cin_pad):
    """One grid step = one batch tile of B examples laid out at stride Lp lanes."""
    NEG = -3.0e38   # Python float stand-in for -inf MaxPool padding; it never survives
                    # the max because the window center is always finite.

    def kernel(*refs):
        if use_pre:
            (x_ref, wb_ref, wbig_ref, shift_ref, o_ref, slab_ref, rhs_ref) = refs
        else:
            (x_ref, wbig_ref, shift_ref, o_ref, slab_ref, rhs_ref) = refs

        # (1) Fill the VMEM slab.  The HBM input already carries the per-example zero
        #     pads, so this is one aligned copy -- or, with the bottleneck, one
        #     (32, Crows) x (Crows, W) MXU matmul (the 1x1 bias-free conv commutes with
        #     zero padding).  Only the TAIL lanes need zeroing here.
        if use_pre:
            slab_ref[:, 0:W] = jnp.dot(
                wb_ref[...], x_ref[...],
                preferred_element_type=jnp.float32).astype(jnp.bfloat16)
        else:
            slab_ref[:, 0:W] = x_ref[...]
        slab_ref[:, W:W + TAIL] = jnp.zeros((Cin_pad, TAIL), jnp.bfloat16)

        # (2) Build the full im2col rhs: row block t holds the slab shifted by t lanes;
        #     the last row block holds MaxPool1d(3, stride=1, pad=-inf) of the slab.
        for t in range(T):
            rhs_ref[t * Cin_pad:(t + 1) * Cin_pad, :] = slab_ref[:, t:t + W]

        lane = jax.lax.broadcasted_iota(jnp.int32, (1, W), 1)
        pos = lane % Lp                                  # position within each example
        center = slab_ref[:, PMAX:PMAX + W]
        left = jnp.where(pos == 0, NEG, slab_ref[:, PMAX - 1:PMAX - 1 + W])
        right = jnp.where(pos == L - 1, NEG, slab_ref[:, PMAX + 1:PMAX + 1 + W])
        rhs_ref[T * Cin_pad:(T + 1) * Cin_pad, :] = \
            jnp.maximum(center, jnp.maximum(left, right))

        # (3) One MXU matmul produces all 4F=128 output channels for every example and
        #     position.  BN scale is folded into the weights; only shift + ReLU remain.
        y = jnp.dot(wbig_ref[...], rhs_ref[...], preferred_element_type=jnp.float32)
        y = jnp.maximum(y + shift_ref[...], 0.0)         # (4F, W) f32

        # (4) Lane-aligned per-example writeback (Lp is a multiple of 128).
        for b in range(B):
            o_ref[b] = y[:, b * Lp:(b + 1) * Lp]

    return kernel


def inception_forward(x, params):
    N, C, L = x.shape
    use_pre = params["wb"] is not None
    Cin = BOTTLENECK if use_pre else C
    Cin_pad = ((Cin + 15) // 16) * 16              # bf16 sublane-packing friendly
    Crows = ((C + 15) // 16) * 16 if use_pre else Cin_pad
    Lp = ((L + 2 * PMAX + 127) // 128) * 128       # per-example lane window (lane-dense)
    F4, F3 = 4 * F, 3 * F
    f32, bf16 = jnp.float32, jnp.bfloat16

    # --- batch tile from a per-step VMEM budget (scratch + double-buffered IO blocks) ---
    per_lane = ((T + 1) * Cin_pad * 2              # im2col rhs (bf16)
                + Cin_pad * 2                      # slab (bf16)
                + 2 * F4 * 4                       # output block, double-buffered (f32)
                + F4 * 4                           # matmul result temporary (f32)
                + (2 * Crows * 2 * L) // Lp + 8)   # input block, double-buffered (bf16)
    budget = 20 * 1024 * 1024
    B = max(1, budget // (per_lane * Lp))
    B = min(B, 32)                                 # bound kernel unrolling
    B = min(B, max(1, (N + 1) // 2))               # keep grid >= 2 (megacore / v7x)
    Nb = ((N + B - 1) // B) * B
    W = B * Lp

    # --- fold BatchNorm(eval): scale into the conv weights, keep only the shift ---
    rstd = 1.0 / jnp.sqrt(params["var"].astype(f32) + BN_EPS)
    scale = params["gamma"].astype(f32) * rstd                       # (4F,)
    shift = (params["beta"].astype(f32)
             - params["mean"].astype(f32) * scale).reshape(F4, 1)

    # --- one (4F, 42*Cin_pad) weight matrix: 41 taps of the 3 stacked banks + maxpool 1x1
    wt = jnp.zeros((T, F3, Cin_pad), f32)
    for i, (key, k, p) in enumerate(zip(("w1", "w2", "w3"), KS, PADS)):
        w = params[key].astype(f32) * scale[i * F:(i + 1) * F][:, None, None]  # (F,Cin,k)
        off = PMAX - p
        wt = wt.at[off:off + k, i * F:(i + 1) * F, :Cin].set(jnp.transpose(w, (2, 0, 1)))
    wbig = jnp.zeros((F4, (T + 1) * Cin_pad), f32)
    wbig = wbig.at[:F3, :T * Cin_pad].set(
        jnp.transpose(wt, (1, 0, 2)).reshape(F3, T * Cin_pad))
    wbig = wbig.at[F3:, T * Cin_pad:T * Cin_pad + Cin].set(
        params["wmp"].astype(f32) * scale[F3:][:, None])
    wbig = wbig.astype(bf16)

    wb_pad = None
    if use_pre:
        wb_pad = jnp.zeros((BOTTLENECK, Crows), f32)
        wb_pad = wb_pad.at[:, :C].set(params["wb"].astype(f32)).astype(bf16)

    # --- lay out x as a zero-padded slab (Crows, Nb*Lp) bf16 in HBM ---
    xs = x.astype(bf16)
    xs = jnp.pad(xs, ((0, Nb - N), (0, Crows - C), (PMAX, Lp - PMAX - L)))
    xslab = jnp.transpose(xs, (1, 0, 2)).reshape(Crows, Nb * Lp)

    in_specs = [pl.BlockSpec((Crows, W), lambda nb: (0, nb))]
    args = [xslab]
    if use_pre:
        in_specs.append(pl.BlockSpec((BOTTLENECK, Crows), lambda nb: (0, 0)))
        args.append(wb_pad)
    in_specs += [pl.BlockSpec((F4, (T + 1) * Cin_pad), lambda nb: (0, 0)),
                 pl.BlockSpec((F4, 1), lambda nb: (0, 0))]
    args += [wbig, shift]

    scratch = [pltpu.VMEM((Cin_pad, W + TAIL), bf16),
               pltpu.VMEM(((T + 1) * Cin_pad, W), bf16)]

    flops = 2 * F4 * (T + 1) * Cin_pad * Nb * Lp
    if use_pre:
        flops += 2 * BOTTLENECK * Crows * Nb * Lp
    bytes_accessed = (Crows * Nb * Lp * 2 + F4 * (T + 1) * Cin_pad * 2
                      + Nb * F4 * Lp * 4)

    out = pl.pallas_call(
        _make_kernel(use_pre, B, L, Lp, W, Cin_pad),
        out_shape=jax.ShapeDtypeStruct((Nb, F4, Lp), f32),
        grid=(Nb // B,),
        in_specs=in_specs,
        out_specs=pl.BlockSpec((B, F4, Lp), lambda nb: (nb, 0, 0)),
        scratch_shapes=scratch,
        compiler_params=pltpu.CompilerParams(
            dimension_semantics=("parallel",),
            vmem_limit_bytes=40 * 1024 * 1024),
        cost_estimate=pl.CostEstimate(flops=int(flops), transcendentals=0,
                                      bytes_accessed=int(bytes_accessed)),
    )(*args)
    return out[:N, :, :L]


def init_params(key, channel_num):
    """Deterministic synthetic parameters matching the nn.Module's shapes."""
    use_pre = channel_num > BOTTLENECK
    cin = BOTTLENECK if use_pre else channel_num
    ks = jax.random.split(key, 9)
    p = {}
    p["wb"] = (0.1 * jax.random.normal(ks[0], (BOTTLENECK, channel_num), jnp.float32)
               ) if use_pre else None
    p["w1"] = 0.1 * jax.random.normal(ks[1], (F, cin, KS[0]), jnp.float32)
    p["w2"] = 0.1 * jax.random.normal(ks[2], (F, cin, KS[1]), jnp.float32)
    p["w3"] = 0.1 * jax.random.normal(ks[3], (F, cin, KS[2]), jnp.float32)
    p["wmp"] = 0.1 * jax.random.normal(ks[4], (F, cin), jnp.float32)
    p["gamma"] = 1.0 + 0.1 * jax.random.normal(ks[5], (4 * F,), jnp.float32)
    p["beta"] = 0.1 * jax.random.normal(ks[6], (4 * F,), jnp.float32)
    p["mean"] = 0.1 * jax.random.normal(ks[7], (4 * F,), jnp.float32)
    p["var"] = jnp.abs(0.5 + 0.1 * jax.random.normal(ks[8], (4 * F,), jnp.float32))
    return p


def _round_bf16(a):
    return a.astype(jnp.bfloat16).astype(jnp.float32)


def ref_forward(x, params, simulate_bf16=False):
    """Pure-JAX reference with PyTorch Conv1d / MaxPool1d / BatchNorm1d(eval) semantics.

    With simulate_bf16=True the activations/weights are rounded to bf16 at the same points
    the kernel rounds them (f32 accumulation everywhere), isolating layout/indexing
    correctness from the intrinsic bf16 MXU quantization.
    """
    dn = ("NCH", "OIH", "NCH")
    f32 = jnp.float32
    hp_prec = jax.lax.Precision.HIGHEST
    rnd = _round_bf16 if simulate_bf16 else (lambda a: a)

    scale = params["gamma"].astype(f32) / jnp.sqrt(params["var"].astype(f32) + BN_EPS)
    shift = params["beta"].astype(f32) - params["mean"].astype(f32) * scale

    def conv(inp, w, pad):
        return jax.lax.conv_general_dilated(inp, w, (1,), [(pad, pad)],
                                            dimension_numbers=dn, precision=hp_prec)

    h = rnd(x.astype(f32))
    if params["wb"] is not None:
        h = conv(h, rnd(params["wb"].astype(f32))[:, :, None], 0)
        h = rnd(h)

    L = x.shape[-1]
    outs = []
    for i, (key, k, p) in enumerate(zip(("w1", "w2", "w3"), KS, PADS)):
        wf = rnd(params[key].astype(f32) * scale[i * F:(i + 1) * F][:, None, None])
        outs.append(conv(h, wf, p))
    hp = jnp.pad(h, ((0, 0), (0, 0), (1, 1)), constant_values=-jnp.inf)
    pooled = jnp.maximum(hp[:, :, 0:L], jnp.maximum(hp[:, :, 1:L + 1], hp[:, :, 2:L + 2]))
    wmpf = rnd(params["wmp"].astype(f32) * scale[3 * F:][:, None])
    outs.append(conv(pooled, wmpf[:, :, None], 0))
    cat = jnp.concatenate(outs, axis=1)
    return jnp.maximum(cat + shift[None, :, None], 0.0)


if __name__ == "__main__":
    key = jax.random.PRNGKey(0)
    kx, kp, kp2 = jax.random.split(key, 3)

    # Config 1: channel_num=4 (<= bottleneck_size -> no pre_module), N=2, L=64.
    N, C, L = 2, 4, 64
    x = jax.random.normal(kx, (N, C, L), jnp.float32)
    params = init_params(kp, C)
    out = inception_forward(x, params)
    jax.block_until_ready(out)
    assert out.shape == (N, 4 * F, L)
    # Tight check vs. a bf16-rounding-matched reference (layout/indexing correctness).
    np.testing.assert_allclose(np.asarray(out),
                               np.asarray(ref_forward(x, params, simulate_bf16=True)),
                               rtol=5e-3, atol=5e-3)
    # Loose sanity check vs. the true f32 reference (bf16 MXU quantization tolerance).
    np.testing.assert_allclose(np.asarray(out),
                               np.asarray(ref_forward(x, params)),
                               rtol=1e-1, atol=3e-1)

    # Config 2: channel_num=48 (> 32 -> exercises the 1x1 bottleneck pre_module).
    C2 = 48
    x2 = jax.random.normal(jax.random.PRNGKey(1), (N, C2, L), jnp.float32)
    params2 = init_params(kp2, C2)
    out2 = inception_forward(x2, params2)
    jax.block_until_ready(out2)
    np.testing.assert_allclose(np.asarray(out2),
                               np.asarray(ref_forward(x2, params2, simulate_bf16=True)),
                               rtol=5e-3, atol=5e-3)
    np.testing.assert_allclose(np.asarray(out2),
                               np.asarray(ref_forward(x2, params2)),
                               rtol=1e-1, atol=3e-1)

    print("KERNEL_OK")
</pallas_src>

<mosaic_0001>
module attributes {stable_mosaic.version = 11 : i64} {
  func.func @kernel(%arg0: i32, %arg1: memref<16x128xbf16, #tpu.memory_space<vmem>>, %arg2: memref<128x672xbf16, #tpu.memory_space<vmem>>, %arg3: memref<128x1xf32, #tpu.memory_space<vmem>>, %arg4: memref<1x128x128xf32, #tpu.memory_space<vmem>>, %arg5: memref<16x256xbf16, #tpu.memory_space<vmem>>, %arg6: memref<672x128xbf16, #tpu.memory_space<vmem>>) attributes {dimension_semantics = [#tpu.dimension_semantics<parallel>], iteration_bounds = array<i64: 2>, scalar_prefetch = 0 : i64, scratch_operands = 2 : i64, tpu.core_type = #tpu.core_type<tc>, window_params = [{transform_indices = @transform_0, window_bounds = array<i64: 16, 128>}, {pipeline_mode = #tpu.pipeline_mode<synchronous>, transform_indices = @transform_1, window_bounds = array<i64: 128, 672>}, {pipeline_mode = #tpu.pipeline_mode<synchronous>, transform_indices = @transform_2, window_bounds = array<i64: 128, 1>}, {transform_indices = @transform_3, window_bounds = array<i64: 1, 128, 128>}]} {
    %c0 = arith.constant 0 : index
    %c0_0 = arith.constant 0 : index
    %0 = vector.load %arg1[%c0, %c0_0] : memref<16x128xbf16, #tpu.memory_space<vmem>>, vector<16x128xbf16>
    %c0_1 = arith.constant 0 : index
    %c0_2 = arith.constant 0 : index
    %1 = vector.load %arg5[%c0_1, %c0_2] : memref<16x256xbf16, #tpu.memory_space<vmem>>, vector<16x128xbf16>
    tpu.vector_store %arg5[%c0_1, %c0_2], %0 {strides = array<i32>} : memref<16x256xbf16, #tpu.memory_space<vmem>>, vector<16x128xbf16>,
    %cst = arith.constant 0.000000e+00 : bf16
    %2 = vector.broadcast %cst : bf16 to vector<16x128xbf16>
    %c0_3 = arith.constant 0 : index
    %c128 = arith.constant 128 : index
    %3 = vector.load %arg5[%c0_3, %c128] : memref<16x256xbf16, #tpu.memory_space<vmem>>, vector<16x128xbf16>
    tpu.vector_store %arg5[%c0_3, %c128], %2 {strides = array<i32>} : memref<16x256xbf16, #tpu.memory_space<vmem>>, vector<16x128xbf16>,
    %c0_4 = arith.constant 0 : index
    %c0_5 = arith.constant 0 : index
    %4 = vector.load %arg5[%c0_4, %c0_5] : memref<16x256xbf16, #tpu.memory_space<vmem>>, vector<16x128xbf16>
    %c0_6 = arith.constant 0 : index
    %c0_7 = arith.constant 0 : index
    %5 = vector.load %arg6[%c0_6, %c0_7] : memref<672x128xbf16, #tpu.memory_space<vmem>>, vector<16x128xbf16>
    tpu.vector_store %arg6[%c0_6, %c0_7], %4 {strides = array<i32>} : memref<672x128xbf16, #tpu.memory_space<vmem>>, vector<16x128xbf16>,
    %c0_8 = arith.constant 0 : index
    %c1 = arith.constant 1 : index
    %6 = vector.load %arg5[%c0_8, %c1] : memref<16x256xbf16, #tpu.memory_space<vmem>>, vector<16x128xbf16>
    %c16 = arith.constant 16 : index
    %c0_9 = arith.constant 0 : index
    %7 = vector.load %arg6[%c16, %c0_9] : memref<672x128xbf16, #tpu.memory_space<vmem>>, vector<16x128xbf16>
    tpu.vector_store %arg6[%c16, %c0_9], %6 {strides = array<i32>} : memref<672x128xbf16, #tpu.memory_space<vmem>>, vector<16x128xbf16>,
    %c0_10 = arith.constant 0 : index
    %c2 = arith.constant 2 : index
    %8 = vector.load %arg5[%c0_10, %c2] : memref<16x256xbf16, #tpu.memory_space<vmem>>, vector<16x128xbf16>
    %c32 = arith.constant 32 : index
    %c0_11 = arith.constant 0 : index
    %9 = vector.load %arg6[%c32, %c0_11] : memref<672x128xbf16, #tpu.memory_space<vmem>>, vector<16x128xbf16>
    tpu.vector_store %arg6[%c32, %c0_11], %8 {strides = array<i32>} : memref<672x128xbf16, #tpu.memory_space<vmem>>, vector<16x128xbf16>,
    %c0_12 = arith.constant 0 : index
    %c3 = arith.constant 3 : index
    %10 = vector.load %arg5[%c0_12, %c3] : memref<16x256xbf16, #tpu.memory_space<vmem>>, vector<16x128xbf16>
    %c48 = arith.constant 48 : index
    %c0_13 = arith.constant 0 : index
    %11 = vector.load %arg6[%c48, %c0_13] : memref<672x128xbf16, #tpu.memory_space<vmem>>, vector<16x128xbf16>
    tpu.vector_store %arg6[%c48, %c0_13], %10 {strides = array<i32>} : memref<672x128xbf16, #tpu.memory_space<vmem>>, vector<16x128xbf16>,
    %c0_14 = arith.constant 0 : index
    %c4 = arith.constant 4 : index
    %12 = vector.load %arg5[%c0_14, %c4] : memref<16x256xbf16, #tpu.memory_space<vmem>>, vector<16x128xbf16>
    %c64 = arith.constant 64 : index
    %c0_15 = arith.constant 0 : index
    %13 = vector.load %arg6[%c64, %c0_15] : memref<672x128xbf16, #tpu.memory_space<vmem>>, vector<16x128xbf16>
    tpu.vector_store %arg6[%c64, %c0_15], %12 {strides = array<i32>} : memref<672x128xbf16, #tpu.memory_space<vmem>>, vector<16x128xbf16>,
    %c0_16 = arith.constant 0 : index
    %c5 = arith.constant 5 : index
    %14 = vector.load %arg5[%c0_16, %c5] : memref<16x256xbf16, #tpu.memory_space<vmem>>, vector<16x128xbf16>
    %c80 = arith.constant 80 : index
    %c0_17 = arith.constant 0 : index
    %15 = vector.load %arg6[%c80, %c0_17] : memref<672x128xbf16, #tpu.memory_space<vmem>>, vector<16x128xbf16>
    tpu.vector_store %arg6[%c80, %c0_17], %14 {strides = array<i32>} : memref<672x128xbf16, #tpu.memory_space<vmem>>, vector<16x128xbf16>,
    %c0_18 = arith.constant 0 : index
    %c6 = arith.constant 6 : index
    %16 = vector.load %arg5[%c0_18, %c6] : memref<16x256xbf16, #tpu.memory_space<vmem>>, vector<16x128xbf16>
    %c96 = arith.constant 96 : index
    %c0_19 = arith.constant 0 : index
    %17 = vector.load %arg6[%c96, %c0_19] : memref<672x128xbf16, #tpu.memory_space<vmem>>, vector<16x128xbf16>
    tpu.vector_store %arg6[%c96, %c0_19], %16 {strides = array<i32>} : memref<672x128xbf16, #tpu.memory_space<vmem>>, vector<16x128xbf16>,
    %c0_20 = arith.constant 0 : index
    %c7 = arith.constant 7 : index
    %18 = vector.load %arg5[%c0_20, %c7] : memref<16x256xbf16, #tpu.memory_space<vmem>>, vector<16x128xbf16>
    %c112 = arith.constant 112 : index
    %c0_21 = arith.constant 0 : index
    %19 = vector.load %arg6[%c112, %c0_21] : memref<672x128xbf16, #tpu.memory_space<vmem>>, vector<16x128xbf16>
    tpu.vector_store %arg6[%c112, %c0_21], %18 {strides = array<i32>} : memref<672x128xbf16, #tpu.memory_space<vmem>>, vector<16x128xbf16>,
    %c0_22 = arith.constant 0 : index
    %c8 = arith.constant 8 : index
    %20 = vector.load %arg5[%c0_22, %c8] : memref<16x256xbf16, #tpu.memory_space<vmem>>, vector<16x128xbf16>
    %c128_23 = arith.constant 128 : index
    %c0_24 = arith.constant 0 : index
    %21 = vector.load %arg6[%c128_23, %c0_24] : memref<672x128xbf16, #tpu.memory_space<vmem>>, vector<16x128xbf16>
    tpu.vector_store %arg6[%c128_23, %c0_24], %20 {strides = array<i32>} : memref<672x128xbf16, #tpu.memory_space<vmem>>, vector<16x128xbf16>,
    %c0_25 = arith.constant 0 : index
    %c9 = arith.constant 9 : index
    %22 = vector.load %arg5[%c0_25, %c9] : memref<16x256xbf16, #tpu.memory_space<vmem>>, vector<16x128xbf16>
    %c144 = arith.constant 144 : index
    %c0_26 = arith.constant 0 : index
    %23 = vector.load %arg6[%c144, %c0_26] : memref<672x128xbf16, #tpu.memory_space<vmem>>, vector<16x128xbf16>
    tpu.vector_store %arg6[%c144, %c0_26], %22 {strides = array<i32>} : memref<672x128xbf16, #tpu.memory_space<vmem>>, vector<16x128xbf16>,
    %c0_27 = arith.constant 0 : index
    %c10 = arith.constant 10 : index
    %24 = vector.load %arg5[%c0_27, %c10] : memref<16x256xbf16, #tpu.memory_space<vmem>>, vector<16x128xbf16>
    %c160 = arith.constant 160 : index
    %c0_28 = arith.constant 0 : index
    %25 = vector.load %arg6[%c160, %c0_28] : memref<672x128xbf16, #tpu.memory_space<vmem>>, vector<16x128xbf16>
    tpu.vector_store %arg6[%c160, %c0_28], %24 {strides = array<i32>} : memref<672x128xbf16, #tpu.memory_space<vmem>>, vector<16x128xbf16>,
    %c0_29 = arith.constant 0 : index
    %c11 = arith.constant 11 : index
    %26 = vector.load %arg5[%c0_29, %c11] : memref<16x256xbf16, #tpu.memory_space<vmem>>, vector<16x128xbf16>
    %c176 = arith.constant 176 : index
    %c0_30 = arith.constant 0 : index
    %27 = vector.load %arg6[%c176, %c0_30] : memref<672x128xbf16, #tpu.memory_space<vmem>>, vector<16x128xbf16>
    tpu.vector_store %arg6[%c176, %c0_30], %26 {strides = array<i32>} : memref<672x128xbf16, #tpu.memory_space<vmem>>, vector<16x128xbf16>,
    %c0_31 = arith.constant 0 : index
    %c12 = arith.constant 12 : index
    %28 = vector.load %arg5[%c0_31, %c12] : memref<16x256xbf16, #tpu.memory_space<vmem>>, vector<16x128xbf16>
    %c192 = arith.constant 192 : index
    %c0_32 = arith.constant 0 : index
    %29 = vector.load %arg6[%c192, %c0_32] : memref<672x128xbf16, #tpu.memory_space<vmem>>, vector<16x128xbf16>
    tpu.vector_store %arg6[%c192, %c0_32], %28 {strides = array<i32>} : memref<672x128xbf16, #tpu.memory_space<vmem>>, vector<16x128xbf16>,
    %c0_33 = arith.constant 0 : index
    %c13 = arith.constant 13 : index
    %30 = vector.load %arg5[%c0_33, %c13] : memref<16x256xbf16, #tpu.memory_space<vmem>>, vector<16x128xbf16>
    %c208 = arith.constant 208 : index
    %c0_34 = arith.constant 0 : index
    %31 = vector.load %arg6[%c208, %c0_34] : memref<672x128xbf16, #tpu.memory_space<vmem>>, vector<16x128xbf16>
    tpu.vector_store %arg6[%c208, %c0_34], %30 {strides = array<i32>} : memref<672x128xbf16, #tpu.memory_space<vmem>>, vector<16x128xbf16>,
    %c0_35 = arith.constant 0 : index
    %c14 = arith.constant 14 : index
    %32 = vector.load %arg5[%c0_35, %c14] : memref<16x256xbf16, #tpu.memory_space<vmem>>, vector<16x128xbf16>
    %c224 = arith.constant 224 : index
    %c0_36 = arith.constant 0 : index
    %33 = vector.load %arg6[%c224, %c0_36] : memref<672x128xbf16, #tpu.memory_space<vmem>>, vector<16x128xbf16>
    tpu.vector_store %arg6[%c224, %c0_36], %32 {strides = array<i32>} : memref<672x128xbf16, #tpu.memory_space<vmem>>, vector<16x128xbf16>,
    %c0_37 = arith.constant 0 : index
    %c15 = arith.constant 15 : index
    %34 = vector.load %arg5[%c0_37, %c15] : memref<16x256xbf16, #tpu.memory_space<vmem>>, vector<16x128xbf16>
    %c240 = arith.constant 240 : index
    %c0_38 = arith.constant 0 : index
    %35 = vector.load %arg6[%c240, %c0_38] : memref<672x128xbf16, #tpu.memory_space<vmem>>, vector<16x128xbf16>
    tpu.vector_store %arg6[%c240, %c0_38], %34 {strides = array<i32>} : memref<672x128xbf16, #tpu.memory_space<vmem>>, vector<16x128xbf16>,
    %c0_39 = arith.constant 0 : index
    %c16_40 = arith.constant 16 : index
    %36 = vector.load %arg5[%c0_39, %c16_40] : memref<16x256xbf16, #tpu.memory_space<vmem>>, vector<16x128xbf16>
    %c256 = arith.constant 256 : index
    %c0_41 = arith.constant 0 : index
    %37 = vector.load %arg6[%c256, %c0_41] : memref<672x128xbf16, #tpu.memory_space<vmem>>, vector<16x128xbf16>
    tpu.vector_store %arg6[%c256, %c0_41], %36 {strides = array<i32>} : memref<672x128xbf16, #tpu.memory_space<vmem>>, vector<16x128xbf16>,
    %c0_42 = arith.constant 0 : index
    %c17 = arith.constant 17 : index
    %38 = vector.load %arg5[%c0_42, %c17] : memref<16x256xbf16, #tpu.memory_space<vmem>>, vector<16x128xbf16>
    %c272 = arith.constant 272 : index
    %c0_43 = arith.constant 0 : index
    %39 = vector.load %arg6[%c272, %c0_43] : memref<672x128xbf16, #tpu.memory_space<vmem>>, vector<16x128xbf16>
    tpu.vector_store %arg6[%c272, %c0_43], %38 {strides = array<i32>} : memref<672x128xbf16, #tpu.memory_space<vmem>>, vector<16x128xbf16>,
    %c0_44 = arith.constant 0 : index
    %c18 = arith.constant 18 : index
    %40 = vector.load %arg5[%c0_44, %c18] : memref<16x256xbf16, #tpu.memory_space<vmem>>, vector<16x128xbf16>
    %c288 = arith.constant 288 : index
    %c0_45 = arith.constant 0 : index
    %41 = vector.load %arg6[%c288, %c0_45] : memref<672x128xbf16, #tpu.memory_space<vmem>>, vector<16x128xbf16>
    tpu.vector_store %arg6[%c288, %c0_45], %40 {strides = array<i32>} : memref<672x128xbf16, #tpu.memory_space<vmem>>, vector<16x128xbf16>,
    %c0_46 = arith.constant 0 : index
    %c19 = arith.constant 19 : index
    %42 = vector.load %arg5[%c0_46, %c19] : memref<16x256xbf16, #tpu.memory_space<vmem>>, vector<16x128xbf16>
    %c304 = arith.constant 304 : index
    %c0_47 = arith.constant 0 : index
    %43 = vector.load %arg6[%c304, %c0_47] : memref<672x128xbf16, #tpu.memory_space<vmem>>, vector<16x128xbf16>
    tpu.vector_store %arg6[%c304, %c0_47], %42 {strides = array<i32>} : memref<672x128xbf16, #tpu.memory_space<vmem>>, vector<16x128xbf16>,
    %c0_48 = arith.constant 0 : index
    %c20 = arith.constant 20 : index
    %44 = vector.load %arg5[%c0_48, %c20] : memref<16x256xbf16, #tpu.memory_space<vmem>>, vector<16x128xbf16>
    %c320 = arith.constant 320 : index
    %c0_49 = arith.constant 0 : index
    %45 = vector.load %arg6[%c320, %c0_49] : memref<672x128xbf16, #tpu.memory_space<vmem>>, vector<16x128xbf16>
    tpu.vector_store %arg6[%c320, %c0_49], %44 {strides = array<i32>} : memref<672x128xbf16, #tpu.memory_space<vmem>>, vector<16x128xbf16>,
    %c0_50 = arith.constant 0 : index
    %c21 = arith.constant 21 : index
    %46 = vector.load %arg5[%c0_50, %c21] : memref<16x256xbf16, #tpu.memory_space<vmem>>, vector<16x128xbf16>
    %c336 = arith.constant 336 : index
    %c0_51 = arith.constant 0 : index
    %47 = vector.load %arg6[%c336, %c0_51] : memref<672x128xbf16, #tpu.memory_space<vmem>>, vector<16x128xbf16>
    tpu.vector_store %arg6[%c336, %c0_51], %46 {strides = array<i32>} : memref<672x128xbf16, #tpu.memory_space<vmem>>, vector<16x128xbf16>,
    %c0_52 = arith.constant 0 : index
    %c22 = arith.constant 22 : index
    %48 = vector.load %arg5[%c0_52, %c22] : memref<16x256xbf16, #tpu.memory_space<vmem>>, vector<16x128xbf16>
    %c352 = arith.constant 352 : index
    %c0_53 = arith.constant 0 : index
    %49 = vector.load %arg6[%c352, %c0_53] : memref<672x128xbf16, #tpu.memory_space<vmem>>, vector<16x128xbf16>
    tpu.vector_store %arg6[%c352, %c0_53], %48 {strides = array<i32>} : memref<672x128xbf16, #tpu.memory_space<vmem>>, vector<16x128xbf16>,
    %c0_54 = arith.constant 0 : index
    %c23 = arith.constant 23 : index
    %50 = vector.load %arg5[%c0_54, %c23] : memref<16x256xbf16, #tpu.memory_space<vmem>>, vector<16x128xbf16>
    %c368 = arith.constant 368 : index
    %c0_55 = arith.constant 0 : index
    %51 = vector.load %arg6[%c368, %c0_55] : memref<672x128xbf16, #tpu.memory_space<vmem>>, vector<16x128xbf16>
    tpu.vector_store %arg6[%c368, %c0_55], %50 {strides = array<i32>} : memref<672x128xbf16, #tpu.memory_space<vmem>>, vector<16x128xbf16>,
    %c0_56 = arith.constant 0 : index
    %c24 = arith.constant 24 : index
    %52 = vector.load %arg5[%c0_56, %c24] : memref<16x256xbf16, #tpu.memory_space<vmem>>, vector<16x128xbf16>
    %c384 = arith.constant 384 : index
    %c0_57 = arith.constant 0 : index
    %53 = vector.load %arg6[%c384, %c0_57] : memref<672x128xbf16, #tpu.memory_space<vmem>>, vector<16x128xbf16>
    tpu.vector_store %arg6[%c384, %c0_57], %52 {strides = array<i32>} : memref<672x128xbf16, #tpu.memory_space<vmem>>, vector<16x128xbf16>,
    %c0_58 = arith.constant 0 : index
    %c25 = arith.constant 25 : index
    %54 = vector.load %arg5[%c0_58, %c25] : memref<16x256xbf16, #tpu.memory_space<vmem>>, vector<16x128xbf16>
    %c400 = arith.constant 400 : index
    %c0_59 = arith.constant 0 : index
    %55 = vector.load %arg6[%c400, %c0_59] : memref<672x128xbf16, #tpu.memory_space<vmem>>, vector<16x128xbf16>
    tpu.vector_store %arg6[%c400, %c0_59], %54 {strides = array<i32>} : memref<672x128xbf16, #tpu.memory_space<vmem>>, vector<16x128xbf16>,
    %c0_60 = arith.constant 0 : index
    %c26 = arith.constant 26 : index
    %56 = vector.load %arg5[%c0_60, %c26] : memref<16x256xbf16, #tpu.memory_space<vmem>>, vector<16x128xbf16>
    %c416 = arith.constant 416 : index
    %c0_61 = arith.constant 0 : index
    %57 = vector.load %arg6[%c416, %c0_61] : memref<672x128xbf16, #tpu.memory_space<vmem>>, vector<16x128xbf16>
    tpu.vector_store %arg6[%c416, %c0_61], %56 {strides = array<i32>} : memref<672x128xbf16, #tpu.memory_space<vmem>>, vector<16x128xbf16>,
    %c0_62 = arith.constant 0 : index
    %c27 = arith.constant 27 : index
    %58 = vector.load %arg5[%c0_62, %c27] : memref<16x256xbf16, #tpu.memory_space<vmem>>, vector<16x128xbf16>
    %c432 = arith.constant 432 : index
    %c0_63 = arith.constant 0 : index
    %59 = vector.load %arg6[%c432, %c0_63] : memref<672x128xbf16, #tpu.memory_space<vmem>>, vector<16x128xbf16>
    tpu.vector_store %arg6[%c432, %c0_63], %58 {strides = array<i32>} : memref<672x128xbf16, #tpu.memory_space<vmem>>, vector<16x128xbf16>,
    %c0_64 = arith.constant 0 : index
    %c28 = arith.constant 28 : index
    %60 = vector.load %arg5[%c0_64, %c28] : memref<16x256xbf16, #tpu.memory_space<vmem>>, vector<16x128xbf16>
    %c448 = arith.constant 448 : index
    %c0_65 = arith.constant 0 : index
    %61 = vector.load %arg6[%c448, %c0_65] : memref<672x128xbf16, #tpu.memory_space<vmem>>, vector<16x128xbf16>
    tpu.vector_store %arg6[%c448, %c0_65], %60 {strides = array<i32>} : memref<672x128xbf16, #tpu.memory_space<vmem>>, vector<16x128xbf16>,
    %c0_66 = arith.constant 0 : index
    %c29 = arith.constant 29 : index
    %62 = vector.load %arg5[%c0_66, %c29] : memref<16x256xbf16, #tpu.memory_space<vmem>>, vector<16x128xbf16>
    %c464 = arith.constant 464 : index
    %c0_67 = arith.constant 0 : index
    %63 = vector.load %arg6[%c464, %c0_67] : memref<672x128xbf16, #tpu.memory_space<vmem>>, vector<16x128xbf16>
    tpu.vector_store %arg6[%c464, %c0_67], %62 {strides = array<i32>} : memref<672x128xbf16, #tpu.memory_space<vmem>>, vector<16x128xbf16>,
    %c0_68 = arith.constant 0 : index
    %c30 = arith.constant 30 : index
    %64 = vector.load %arg5[%c0_68, %c30] : memref<16x256xbf16, #tpu.memory_space<vmem>>, vector<16x128xbf16>
    %c480 = arith.constant 480 : index
    %c0_69 = arith.constant 0 : index
    %65 = vector.load %arg6[%c480, %c0_69] : memref<672x128xbf16, #tpu.memory_space<vmem>>, vector<16x128xbf16>
    tpu.vector_store %arg6[%c480, %c0_69], %64 {strides = array<i32>} : memref<672x128xbf16, #tpu.memory_space<vmem>>, vector<16x128xbf16>,
    %c0_70 = arith.constant 0 : index
    %c31 = arith.constant 31 : index
    %66 = vector.load %arg5[%c0_70, %c31] : memref<16x256xbf16, #tpu.memory_space<vmem>>, vector<16x128xbf16>
    %c496 = arith.constant 496 : index
    %c0_71 = arith.constant 0 : index
    %67 = vector.load %arg6[%c496, %c0_71] : memref<672x128xbf16, #tpu.memory_space<vmem>>, vector<16x128xbf16>
    tpu.vector_store %arg6[%c496, %c0_71], %66 {strides = array<i32>} : memref<672x128xbf16, #tpu.memory_space<vmem>>, vector<16x128xbf16>,
    %c0_72 = arith.constant 0 : index
    %c32_73 = arith.constant 32 : index
    %68 = vector.load %arg5[%c0_72, %c32_73] : memref<16x256xbf16, #tpu.memory_space<vmem>>, vector<16x128xbf16>
    %c512 = arith.constant 512 : index
    %c0_74 = arith.constant 0 : index
    %69 = vector.load %arg6[%c512, %c0_74] : memref<672x128xbf16, #tpu.memory_space<vmem>>, vector<16x128xbf16>
    tpu.vector_store %arg6[%c512, %c0_74], %68 {strides = array<i32>} : memref<672x128xbf16, #tpu.memory_space<vmem>>, vector<16x128xbf16>,
    %c0_75 = arith.constant 0 : index
    %c33 = arith.constant 33 : index
    %70 = vector.load %arg5[%c0_75, %c33] : memref<16x256xbf16, #tpu.memory_space<vmem>>, vector<16x128xbf16>
    %c528 = arith.constant 528 : index
    %c0_76 = arith.constant 0 : index
    %71 = vector.load %arg6[%c528, %c0_76] : memref<672x128xbf16, #tpu.memory_space<vmem>>, vector<16x128xbf16>
    tpu.vector_store %arg6[%c528, %c0_76], %70 {strides = array<i32>} : memref<672x128xbf16, #tpu.memory_space<vmem>>, vector<16x128xbf16>,
    %c0_77 = arith.constant 0 : index
    %c34 = arith.constant 34 : index
    %72 = vector.load %arg5[%c0_77, %c34] : memref<16x256xbf16, #tpu.memory_space<vmem>>, vector<16x128xbf16>
    %c544 = arith.constant 544 : index
    %c0_78 = arith.constant 0 : index
    %73 = vector.load %arg6[%c544, %c0_78] : memref<672x128xbf16, #tpu.memory_space<vmem>>, vector<16x128xbf16>
    tpu.vector_store %arg6[%c544, %c0_78], %72 {strides = array<i32>} : memref<672x128xbf16, #tpu.memory_space<vmem>>, vector<16x128xbf16>,
    %c0_79 = arith.constant 0 : index
    %c35 = arith.constant 35 : index
    %74 = vector.load %arg5[%c0_79, %c35] : memref<16x256xbf16, #tpu.memory_space<vmem>>, vector<16x128xbf16>
    %c560 = arith.constant 560 : index
    %c0_80 = arith.constant 0 : index
    %75 = vector.load %arg6[%c560, %c0_80] : memref<672x128xbf16, #tpu.memory_space<vmem>>, vector<16x128xbf16>
    tpu.vector_store %arg6[%c560, %c0_80], %74 {strides = array<i32>} : memref<672x128xbf16, #tpu.memory_space<vmem>>, vector<16x128xbf16>,
    %c0_81 = arith.constant 0 : index
    %c36 = arith.constant 36 : index
    %76 = vector.load %arg5[%c0_81, %c36] : memref<16x256xbf16, #tpu.memory_space<vmem>>, vector<16x128xbf16>
    %c576 = arith.constant 576 : index
    %c0_82 = arith.constant 0 : index
    %77 = vector.load %arg6[%c576, %c0_82] : memref<672x128xbf16, #tpu.memory_space<vmem>>, vector<16x128xbf16>
    tpu.vector_store %arg6[%c576, %c0_82], %76 {strides = array<i32>} : memref<672x128xbf16, #tpu.memory_space<vmem>>, vector<16x128xbf16>,
    %c0_83 = arith.constant 0 : index
    %c37 = arith.constant 37 : index
    %78 = vector.load %arg5[%c0_83, %c37] : memref<16x256xbf16, #tpu.memory_space<vmem>>, vector<16x128xbf16>
    %c592 = arith.constant 592 : index
    %c0_84 = arith.constant 0 : index
    %79 = vector.load %arg6[%c592, %c0_84] : memref<672x128xbf16, #tpu.memory_space<vmem>>, vector<16x128xbf16>
    tpu.vector_store %arg6[%c592, %c0_84], %78 {strides = array<i32>} : memref<672x128xbf16, #tpu.memory_space<vmem>>, vector<16x128xbf16>,
    %c0_85 = arith.constant 0 : index
    %c38 = arith.constant 38 : index
    %80 = vector.load %arg5[%c0_85, %c38] : memref<16x256xbf16, #tpu.memory_space<vmem>>, vector<16x128xbf16>
    %c608 = arith.constant 608 : index
    %c0_86 = arith.constant 0 : index
    %81 = vector.load %arg6[%c608, %c0_86] : memref<672x128xbf16, #tpu.memory_space<vmem>>, vector<16x128xbf16>
    tpu.vector_store %arg6[%c608, %c0_86], %80 {strides = array<i32>} : memref<672x128xbf16, #tpu.memory_space<vmem>>, vector<16x128xbf16>,
    %c0_87 = arith.constant 0 : index
    %c39 = arith.constant 39 : index
    %82 = vector.load %arg5[%c0_87, %c39] : memref<16x256xbf16, #tpu.memory_space<vmem>>, vector<16x128xbf16>
    %c624 = arith.constant 624 : index
    %c0_88 = arith.constant 0 : index
    %83 = vector.load %arg6[%c624, %c0_88] : memref<672x128xbf16, #tpu.memory_space<vmem>>, vector<16x128xbf16>
    tpu.vector_store %arg6[%c624, %c0_88], %82 {strides = array<i32>} : memref<672x128xbf16, #tpu.memory_space<vmem>>, vector<16x128xbf16>,
    %c0_89 = arith.constant 0 : index
    %c40 = arith.constant 40 : index
    %84 = vector.load %arg5[%c0_89, %c40] : memref<16x256xbf16, #tpu.memory_space<vmem>>, vector<16x128xbf16>
    %c640 = arith.constant 640 : index
    %c0_90 = arith.constant 0 : index
    %85 = vector.load %arg6[%c640, %c0_90] : memref<672x128xbf16, #tpu.memory_space<vmem>>, vector<16x128xbf16>
    tpu.vector_store %arg6[%c640, %c0_90], %84 {strides = array<i32>} : memref<672x128xbf16, #tpu.memory_space<vmem>>, vector<16x128xbf16>,
    %86 = tpu.iota {dimensions = array<i32: 1>} : vector<1x128xi32>
    %c128_i32 = arith.constant 128 : i32
    %c0_i32 = arith.constant 0 : i32
    %87 = arith.cmpi eq, %c128_i32, %c0_i32 : i32
    %c1_i32 = arith.constant 1 : i32
    %88 = arith.select %87, %c1_i32, %c128_i32 : i32
    %89 = vector.broadcast %88 : i32 to vector<1x128xi32>
    %90 = arith.remsi %86, %89 : vector<1x128xi32>
    %c0_i32_91 = arith.constant 0 : i32
    %91 = vector.broadcast %c0_i32_91 : i32 to vector<1x128xi32>
    %92 = arith.cmpi ne, %90, %91 : vector<1x128xi32>
    %c0_i32_92 = arith.constant 0 : i32
    %93 = vector.broadcast %c0_i32_92 : i32 to vector<1x128xi32>
    %94 = arith.cmpi slt, %90, %93 : vector<1x128xi32>
    %c0_i32_93 = arith.constant 0 : i32
    %95 = arith.cmpi slt, %88, %c0_i32_93 : i32
    %96 = vector.broadcast %95 : i1 to vector<1x128xi1>
    %97 = vector.broadcast %96 : vector<1x128xi1> to vector<1x128xi1>
    %98 = arith.xori %94, %97 : vector<1x128xi1>
    %99 = arith.andi %98, %92 : vector<1x128xi1>
    %100 = vector.broadcast %88 : i32 to vector<1x128xi32>
    %101 = arith.addi %90, %100 : vector<1x128xi32>
    %102 = arith.select %99, %101, %90 : vector<1x128xi1>, vector<1x128xi32>
    %c0_94 = arith.constant 0 : index
    %c20_95 = arith.constant 20 : index
    %103 = vector.load %arg5[%c0_94, %c20_95] : memref<16x256xbf16, #tpu.memory_space<vmem>>, vector<16x128xbf16>
    %c0_i32_96 = arith.constant 0 : i32
    %104 = vector.broadcast %c0_i32_96 : i32 to vector<1x128xi32>
    %105 = arith.cmpi eq, %102, %104 : vector<1x128xi32>
    %c0_97 = arith.constant 0 : index
    %c19_98 = arith.constant 19 : index
    %106 = vector.load %arg5[%c0_97, %c19_98] : memref<16x256xbf16, #tpu.memory_space<vmem>>, vector<16x128xbf16>
    %cst_99 = arith.constant -3.000000e+38 : f32
    %107 = arith.truncf %cst_99 : f32 to bf16
    %108 = vector.shape_cast %105 : vector<1x128xi1> to vector<1x128xi1>
    %109 = vector.broadcast %108 : vector<1x128xi1> to vector<16x128xi1>
    %110 = vector.broadcast %107 : bf16 to vector<16x128xbf16>
    %111 = arith.select %109, %110, %106 : vector<16x128xi1>, vector<16x128xbf16>
    %c63_i32 = arith.constant 63 : i32
    %112 = vector.broadcast %c63_i32 : i32 to vector<1x128xi32>
    %113 = arith.cmpi eq, %102, %112 : vector<1x128xi32>
    %c0_100 = arith.constant 0 : index
    %c21_101 = arith.constant 21 : index
    %114 = vector.load %arg5[%c0_100, %c21_101] : memref<16x256xbf16, #tpu.memory_space<vmem>>, vector<16x128xbf16>
    %cst_102 = arith.constant -3.000000e+38 : f32
    %115 = arith.truncf %cst_102 : f32 to bf16
    %116 = vector.shape_cast %113 : vector<1x128xi1> to vector<1x128xi1>
    %117 = vector.broadcast %116 : vector<1x128xi1> to vector<16x128xi1>
    %118 = vector.broadcast %115 : bf16 to vector<16x128xbf16>
    %119 = arith.select %117, %118, %114 : vector<16x128xi1>, vector<16x128xbf16>
    %120 = arith.maximumf %111, %119 : vector<16x128xbf16>
    %121 = arith.maximumf %103, %120 : vector<16x128xbf16>
    %c656 = arith.constant 656 : index
    %c0_103 = arith.constant 0 : index
    %122 = vector.load %arg6[%c656, %c0_103] : memref<672x128xbf16, #tpu.memory_space<vmem>>, vector<16x128xbf16>
    tpu.vector_store %arg6[%c656, %c0_103], %121 {strides = array<i32>} : memref<672x128xbf16, #tpu.memory_space<vmem>>, vector<16x128xbf16>,
    %c0_104 = arith.constant 0 : index
    %c0_105 = arith.constant 0 : index
    %123 = vector.load %arg2[%c0_104, %c0_105] : memref<128x672xbf16, #tpu.memory_space<vmem>>, vector<128x672xbf16>
    %c0_106 = arith.constant 0 : index
    %c0_107 = arith.constant 0 : index
    %124 = vector.load %arg6[%c0_106, %c0_107] : memref<672x128xbf16, #tpu.memory_space<vmem>>, vector<672x128xbf16>
    %cst_108 = arith.constant dense<0.000000e+00> : vector<128x128xf32>
    %125 = tpu.matmul %123, %124, %cst_108 {dimension_numbers = #tpu.dot_dimension_numbers<[1], [0], [0], [1], [0, 0, 1, 1], [], []>} : vector<128x672xbf16>, vector<672x128xbf16>, vector<128x128xf32> -> vector<128x128xf32>
    %c0_109 = arith.constant 0 : index
    %c0_110 = arith.constant 0 : index
    %126 = vector.load %arg3[%c0_109, %c0_110] : memref<128x1xf32, #tpu.memory_space<vmem>>, vector<128x1xf32>
    %127 = vector.broadcast %126 : vector<128x1xf32> to vector<128x128xf32>
    %128 = arith.addf %125, %127 : vector<128x128xf32>
    %cst_111 = arith.constant 0.000000e+00 : f32
    %129 = vector.broadcast %cst_111 : f32 to vector<128x128xf32>
    %130 = arith.maximumf %128, %129 : vector<128x128xf32>
    %c0_112 = arith.constant 0 : index
    %c0_113 = arith.constant 0 : index
    %c0_114 = arith.constant 0 : index
    %131 = vector.load %arg4[%c0_112, %c0_113, %c0_114] : memref<1x128x128xf32, #tpu.memory_space<vmem>>, vector<1x128x128xf32>
    %132 = vector.shape_cast %131 : vector<1x128x128xf32> to vector<128x128xf32>
    %133 = vector.shape_cast %130 : vector<128x128xf32> to vector<1x128x128xf32>
    tpu.vector_store %arg4[%c0_112, %c0_113, %c0_114], %133 {strides = array<i32>} : memref<1x128x128xf32, #tpu.memory_space<vmem>>, vector<1x128x128xf32>,
    return
  }
  func.func @transform_0(%arg0: i32) -> (i32, i32) {
    %c0_i32 = arith.constant 0 : i32
    %c0_i32_0 = arith.constant 0 : i32
    return %c0_i32, %arg0 : i32, i32
  }
  func.func @transform_1(%arg0: i32) -> (i32, i32) {
    %c0_i32 = arith.constant 0 : i32
    %c0_i32_0 = arith.constant 0 : i32
    %c0_i32_1 = arith.constant 0 : i32
    return %c0_i32, %c0_i32_0 : i32, i32
  }
  func.func @transform_2(%arg0: i32) -> (i32, i32) {
    %c0_i32 = arith.constant 0 : i32
    %c0_i32_0 = arith.constant 0 : i32
    %c0_i32_1 = arith.constant 0 : i32
    return %c0_i32, %c0_i32_0 : i32, i32
  }
  func.func @transform_3(%arg0: i32) -> (i32, i32, i32) {
    %c0_i32 = arith.constant 0 : i32
    %c0_i32_0 = arith.constant 0 : i32
    %c0_i32_1 = arith.constant 0 : i32
    return %arg0, %c0_i32, %c0_i32_0 : i32, i32, i32
  }
}

</mosaic_0001>

<llo_original>
// kernel: tpu_custom_call.1
$region0: #{tpu_custom_call.1}
  #allocation0 [shape = 'u32[]', space=smem, size = 0x4, offset = 0x4, fixed_abs, tag = 'smem constant byte address 0x4 - core index']
  #allocation1 [shape = 'u32[144,128]{1,0:T(1,128)}', space=vmem, size = 0x12000, scoped, tag = 'internal scratch']
  #allocation2 [shape = 'bf16[16,256]{1,0:T(16,128)(2,1)}', space=vmem, size = 0x2000, scoped, tag = 'scratch operand']
  #allocation3 [shape = 'bf16[672,128]{1,0:T(16,128)(2,1)}', space=vmem, size = 0x2a000, scoped, tag = 'scratch operand']
  %s0 = inlined_call_operand.vmem [shape: bf16[16,256], index: 0, kind: input, shape index: {}]
  %s1 = inlined_call_operand.vmem [shape: bf16[128,672], index: 1, kind: input, shape index: {}]
  %s2 = inlined_call_operand.vmem [shape: f32[128,1], index: 2, kind: input, shape index: {}]
  %s3 = inlined_call_operand.hbm [shape: f32[2,128,128], index: 3, kind: output, shape index: {}]
  %s4 = sld [smem:[#allocation0]]
  $region86: #{tpu_custom_call.1} parent=0
    _
  %s6 = ssub.s32 1, %s4
  %s7 = scalar_select 0, %s6, %s4
  $region1: #{tpu_custom_call.1} parent=0
    #allocation4 [shape = 'u8[8192]{0}', space=vmem, size = 0x2000, scoped, tag = 'input window, operand 0']
    #allocation5 [shape = 'u8[131072]{0}', space=vmem, size = 0x20000, scoped, tag = 'output window, operand 0']
    #allocation6 [shape = 's32[2]{0}', space=sflag, size = 0x8, scoped, tag = 'scoped memory for tpu_custom_call.1']
    %8 = vsyncpa [#allocation6], 0
    %s9 = scalar_lea.sflag [#allocation6], 1
    %10 = vsyncpa %s9, 0
    loop: start=0, step=1, limit=4
    $region2: #{tpu_custom_call.1} parent=1 // loop_pre_header
      _
    $region3: #{tpu_custom_call.1} parent=1 // loop_header
      %s12 = sphi 0, %s16
      %p13 = scmp.ge.s32.totalorder %s12, 4
      %s22 = sphi 0, %s24
      %s25 = sphi 0, %s22
      %s26 = sphi 0, %s25
      %s42 = sphi 0, %s26
      %s46 = sphi 0, %s46
      %s48 = sphi 0, %s46
      %s49 = sphi 0, %s48
      %s63 = sphi 0, %s49
      %s67 = sphi 0, %s67
      %s69 = sphi 0, %s67
      %s70 = sphi 0, %s69
      %s84 = sphi 0, %s70
      %s90 = sphi 0, %s92
      %s93 = sphi 0, %s90
      %s94 = sphi 0, %s93
      %s110 = sphi 0, %s94
    $region4: #{tpu_custom_call.1} parent=1 // loop_header_branch
      %15 = sbr.rel (%p13) target = $region8
    $region5: #{tpu_custom_call.1} parent=1 // loop_body
      %s17 = ssub.s32 %s12, 1
      %s18 = ssub.s32 %s12, 2
      %s19 = sadd.s32 %s12, 1
      %s20 = ssub.s32 %s12, %s19
      %p21 = scmp.eq.s32.totalorder %s20, 0
      %s23 = sadd.s32 %s22, 1
      %s24 = scalar_select %p21, %s22, %s23
      %p27 = pneg %p21
      %p28 = scmp.eq.s32.totalorder %s12, 1
      %p29 = por %p27, %p28
      %p30 = scmp.ne.s32.totalorder %s22, %s25
      %p31 = scmp.eq.s32.totalorder %s12, 0
      %p32 = por %p30, %p31
      %p33 = scmp.ne.s32.totalorder %s22, %s25
      %p34 = scmp.eq.s32.totalorder %s17, 1
      %p35 = por %p33, %p34
      %p36 = scmp.ne.s32.totalorder %s25, %s26
      %p37 = scmp.eq.s32.totalorder %s17, 0
      %p38 = por %p36, %p37
      %p39 = scmp.ne.s32.totalorder %s25, %s26
      %p40 = scmp.eq.s32.totalorder %s18, 1
      %p41 = por %p39, %p40
      %p43 = scmp.ne.s32.totalorder %s26, %s42
      %p44 = scmp.eq.s32.totalorder %s18, 0
      %p45 = por %p43, %p44
      %s47 = sadd.s32 %s46, 1
      %p50 = scmp.eq.s32.totalorder %s12, 1
      %p51 = scmp.ne.s32.totalorder %s46, %s48
      %p52 = scmp.eq.s32.totalorder %s12, 0
      %p53 = por %p51, %p52
      %p54 = scmp.ne.s32.totalorder %s46, %s48
      %p55 = scmp.eq.s32.totalorder %s17, 1
      %p56 = por %p54, %p55
      %p57 = scmp.ne.s32.totalorder %s48, %s49
      %p58 = scmp.eq.s32.totalorder %s17, 0
      %p59 = por %p57, %p58
      %p60 = scmp.ne.s32.totalorder %s48, %s49
      %p61 = scmp.eq.s32.totalorder %s18, 1
      %p62 = por %p60, %p61
      %p64 = scmp.ne.s32.totalorder %s49, %s63
      %p65 = scmp.eq.s32.totalorder %s18, 0
      %p66 = por %p64, %p65
      %s68 = sadd.s32 %s67, 1
      %p71 = scmp.eq.s32.totalorder %s12, 1
      %p72 = scmp.ne.s32.totalorder %s67, %s69
      %p73 = scmp.eq.s32.totalorder %s12, 0
      %p74 = por %p72, %p73
      %p75 = scmp.ne.s32.totalorder %s67, %s69
      %p76 = scmp.eq.s32.totalorder %s17, 1
      %p77 = por %p75, %p76
      %p78 = scmp.ne.s32.totalorder %s69, %s70
      %p79 = scmp.eq.s32.totalorder %s17, 0
      %p80 = por %p78, %p79
      %p81 = scmp.ne.s32.totalorder %s69, %s70
      %p82 = scmp.eq.s32.totalorder %s18, 1
      %p83 = por %p81, %p82
      %p85 = scmp.ne.s32.totalorder %s70, %s84
      %p86 = scmp.eq.s32.totalorder %s18, 0
      %p87 = por %p85, %p86
      %s88 = ssub.s32 %s12, %s19
      %p89 = scmp.eq.s32.totalorder %s88, 0
      %s91 = sadd.s32 %s90, 1
      %s92 = scalar_select %p89, %s90, %s91
      %p95 = pneg %p89
      %p96 = scmp.eq.s32.totalorder %s12, 1
      %p97 = por %p95, %p96
      %p98 = scmp.ne.s32.totalorder %s90, %s93
      %p99 = scmp.eq.s32.totalorder %s12, 0
      %p100 = por %p98, %p99
      %p101 = scmp.ne.s32.totalorder %s90, %s93
      %p102 = scmp.eq.s32.totalorder %s17, 1
      %p103 = por %p101, %p102
      %p104 = scmp.ne.s32.totalorder %s93, %s94
      %p105 = scmp.eq.s32.totalorder %s17, 0
      %p106 = por %p104, %p105
      %p107 = scmp.ne.s32.totalorder %s93, %s94
      %p108 = scmp.eq.s32.totalorder %s18, 1
      %p109 = por %p107, %p108
      %p111 = scmp.ne.s32.totalorder %s94, %s110
      %p112 = scmp.eq.s32.totalorder %s18, 0
      %p113 = por %p111, %p112
      %p114 = scmp.le.s32.totalorder 1, %s12
      %p115 = scmp.lt.s32.totalorder %s12, 3
      %p116 = pnand %p114, %p115
      %p117 = pneg %p116
      // Predicated region
      $region9: #{tpu_custom_call.1} parent=5 // pred_check
        _
      $region10: #{tpu_custom_call.1} parent=5 // pred_check_branch
        %119 = sbr.rel (%p116) target = $region12
      $region11: #{tpu_custom_call.1} parent=5 // pred_region
        %s120 = ssub.s32 %s12, 1
        // Predicated region
        $region13: #{tpu_custom_call.1} parent=11 // pred_check
          %p121 = pneg %p59
        $region14: #{tpu_custom_call.1} parent=11 // pred_check_branch
          %123 = sbr.rel (%p121) target = $region16
        $region15: #{tpu_custom_call.1} parent=11 // pred_region
          _
        $region16: #{tpu_custom_call.1} parent=11 // pred_fallthru
          _
        // Predicated region
        $region17: #{tpu_custom_call.1} parent=11 // pred_check
          %p124 = pneg %p80
        $region18: #{tpu_custom_call.1} parent=11 // pred_check_branch
          %126 = sbr.rel (%p124) target = $region20
        $region19: #{tpu_custom_call.1} parent=11 // pred_region
          _
        $region20: #{tpu_custom_call.1} parent=11 // pred_fallthru
          _
      $region12: #{tpu_custom_call.1} parent=5 // pred_fallthru
        _
      %p127 = scmp.lt.s32.totalorder %s12, 2
      // Predicated region
      $region21: #{tpu_custom_call.1} parent=5 // pred_check
        %p128 = pneg %p127
      $region22: #{tpu_custom_call.1} parent=5 // pred_check_branch
        %130 = sbr.rel (%p128) target = $region24
      $region23: #{tpu_custom_call.1} parent=5 // pred_region
        // Predicated region
        $region25: #{tpu_custom_call.1} parent=23 // pred_check
          %p131 = pneg %p32
        $region26: #{tpu_custom_call.1} parent=23 // pred_check_branch
          %133 = sbr.rel (%p131) target = $region28
        $region27: #{tpu_custom_call.1} parent=23 // pred_region
          %s134 = sand.u32 %s22, 1
          %s135 = sand.u32 %s22, 1
          %s136 = smul.addr %s135, 8
          %s137 = scalar_lea.vmem [#allocation4], %s136
          %s138 = smul.addr %s12, 4
          %s139 = scalar_lea.vmem %s0, %s138
          // Predicated region
          $region29: #{tpu_custom_call.1} parent=27 // pred_check
            _
          $region30: #{tpu_custom_call.1} parent=27 // pred_check_branch
            %141 = sbr.rel (0) target = $region32
          $region31: #{tpu_custom_call.1} parent=27 // pred_region
            // Predicated region
            $region33: #{tpu_custom_call.1} parent=31 // pred_check
              _
            $region34: #{tpu_custom_call.1} parent=31 // pred_check_branch
              %143 = sbr.rel target = $region36
            $region35: #{tpu_custom_call.1} parent=31 // pred_region
              // Predicated region
              $region48: #{tpu_custom_call.1} parent=35 // pred_check
                _
              $region49: #{tpu_custom_call.1} parent=35 // pred_check_branch
                %160 = sbr.rel (0) target = $region51
              $region50: #{tpu_custom_call.1} parent=35 // pred_region
                loop: start=0, step=1, limit=1
                $region52: #{tpu_custom_call.1} parent=50 // loop_pre_header
                  _
                $region53: #{tpu_custom_call.1} parent=50 // loop_header
                  %s162 = sphi 0, %s166
                  %p163 = scmp.ge.s32.totalorder %s162, 1
                  %s167 = sphi %s139, %s139
                  %s168 = sphi %s137, %s137
                $region54: #{tpu_custom_call.1} parent=50 // loop_header_branch
                  %165 = sbr.rel (%p163) target = $region58
                $region55: #{tpu_custom_call.1} parent=50 // loop_body
                  _
                $region56: #{tpu_custom_call.1} parent=50 // loop_footer
                  %s166 = sadd.s32 1, %s162
                $region57: #{tpu_custom_call.1} parent=50 // loop_footer_branch
                  %161 = sbr.rel target = $region53
                $region58: #{tpu_custom_call.1} parent=50 // loop_exit
                  _
                loop: start=0, step=1, limit=1
                $region59: #{tpu_custom_call.1} parent=50 // loop_pre_header
                  _
                $region60: #{tpu_custom_call.1} parent=50 // loop_header
                  %s171 = sphi 0, %s175
                  %p172 = scmp.ge.s32.totalorder %s171, 1
                  %s176 = sphi %s139, %s139
                  %s177 = sphi %s137, %s137
                $region61: #{tpu_custom_call.1} parent=50 // loop_header_branch
                  %174 = sbr.rel (%p172) target = $region65
                $region62: #{tpu_custom_call.1} parent=50 // loop_body
                  %v178 = vld [vmem:[%s176] sm:$0xf]
                  %179 = vst [vmem:[%s177] sm:$0xf] %v178
                  %v180 = vld [vmem:[%s176 + $0x8] sm:$0xf]
                  %181 = vst [vmem:[%s177 + $0x4] sm:$0xf] %v180
                $region63: #{tpu_custom_call.1} parent=50 // loop_footer
                  %s175 = sadd.s32 1, %s171
                $region64: #{tpu_custom_call.1} parent=50 // loop_footer_branch
                  %170 = sbr.rel target = $region60
                $region65: #{tpu_custom_call.1} parent=50 // loop_exit
                  _
              $region51: #{tpu_custom_call.1} parent=35 // pred_fallthru
                _
            $region36: #{tpu_custom_call.1} parent=31 // pred_fallthru
              _
            // Predicated region
            $region37: #{tpu_custom_call.1} parent=31 // pred_check
              _
            $region38: #{tpu_custom_call.1} parent=31 // pred_check_branch
              %145 = sbr.rel (0) target = $region40
            $region39: #{tpu_custom_call.1} parent=31 // pred_region
              loop: start=0, step=1, limit=1
              $region41: #{tpu_custom_call.1} parent=39 // loop_pre_header
                _
              $region42: #{tpu_custom_call.1} parent=39 // loop_header
                %s148 = sphi 0, %s152
                %p149 = scmp.ge.s32.totalorder %s148, 1
                %s153 = sphi %s139, %s139
                %s154 = sphi %s137, %s137
              $region43: #{tpu_custom_call.1} parent=39 // loop_header_branch
                %151 = sbr.rel (%p149) target = $region47
              $region44: #{tpu_custom_call.1} parent=39 // loop_body
                %v155 = vld [vmem:[%s153] sm:$0xf]
                %156 = vst [vmem:[%s154] sm:$0xf] %v155
                %v157 = vld [vmem:[%s153 + $0x8] sm:$0xf]
                %158 = vst [vmem:[%s154 + $0x4] sm:$0xf] %v157
              $region45: #{tpu_custom_call.1} parent=39 // loop_footer
                %s152 = sadd.s32 1, %s148
              $region46: #{tpu_custom_call.1} parent=39 // loop_footer_branch
                %147 = sbr.rel target = $region42
              $region47: #{tpu_custom_call.1} parent=39 // loop_exit
                _
            $region40: #{tpu_custom_call.1} parent=31 // pred_fallthru
              _
          $region32: #{tpu_custom_call.1} parent=27 // pred_fallthru
            _
          %182 = vnop
        $region28: #{tpu_custom_call.1} parent=23 // pred_fallthru
          _
      $region24: #{tpu_custom_call.1} parent=5 // pred_fallthru
        _
      %p183 = scmp.le.s32.totalorder 1, %s12
      %p184 = scmp.lt.s32.totalorder %s12, 3
      %p185 = pnand %p183, %p184
      %p186 = pneg %p185
      // Predicated region
      $region66: #{tpu_custom_call.1} parent=5 // pred_check
        _
      $region67: #{tpu_custom_call.1} parent=5 // pred_check_branch
        %188 = sbr.rel (%p185) target = $region69
      $region68: #{tpu_custom_call.1} parent=5 // pred_region
        %s189 = ssub.s32 %s12, 1
        %s190 = sand.u32 %s25, 1
        %s191 = sand.u32 %s25, 1
        %s192 = smul.addr %s191, 8
        %s193 = scalar_lea.vmem [#allocation4], %s192
        // Predicated region
        $region70: #{tpu_custom_call.1} parent=68 // pred_check
          %p194 = pneg %p38
        $region71: #{tpu_custom_call.1} parent=68 // pred_check_branch
          %196 = sbr.rel (%p194) target = $region73
        $region72: #{tpu_custom_call.1} parent=68 // pred_region
          _
        $region73: #{tpu_custom_call.1} parent=68 // pred_fallthru
          _
        %s197 = sand.u32 %s25, 1
        %s198 = sand.u32 %s25, 1
        %s199 = smul.addr %s198, 8
        %s200 = scalar_lea.vmem [#allocation4], %s199
        %p201 = pneg %p38
        %p202 = pneg %p35
        %p203 = pneg %p59
        %p204 = pneg %p56
        %p205 = pneg %p80
        %p206 = pneg %p77
        %p207 = pneg %p106
        %p208 = pneg %p103
        %s209 = sand.u32 %s93, 1
        %s210 = scalar_lea.sflag [#allocation6], %s209
        %s211 = sand.u32 %s93, 1
        %s212 = smul.addr %s211, 128
        %s213 = scalar_lea.vmem [#allocation5], %s212
        %v217 = vld [vmem:[%s193] sm:$0xf]
        %v218 = vld [vmem:[%s193 + $0x4] sm:$0xf]
        %v221 = vunpack.c.l.b16 %v217
        %v222 = vunpack.c.l.b16 %v218
        %v223 = vpack.c.b16 %v222, %v221
        %225 = vst [vmem:[#allocation2] sm:$0xff] %v223
        %226 = vst [vmem:[#allocation2 + $0x8] sm:$0xff] 0
        %v227 = vld [vmem:[#allocation2] sm:$0xff]
        %228 = vst [vmem:[#allocation3] sm:$0xff] %v227
        %v229 = vld [vmem:[#allocation2] sm:$0xff]
        %v230 = vld [vmem:[#allocation2 + $0x8] sm:$0xff]
        %233 = vrot.lane.b32.xlu0 %v229, 127
        %v234 = vpop.permute.xlu0 %233
        %235 = vrot.lane.b32.xlu0 %v230, 127
        %v236 = vpop.permute.xlu0 %235
        %vm237 = vcmask 1039360
        %v238 = vsel %vm237, %v234, %v236
        %240 = vst [vmem:[#allocation3 + $0x8] sm:$0xff] %v238
        %v241 = vld [vmem:[#allocation2] sm:$0xff]
        %v242 = vld [vmem:[#allocation2 + $0x8] sm:$0xff]
        %245 = vrot.lane.b32.xlu0 %v241, 126
        %v246 = vpop.permute.xlu0 %245
        %247 = vrot.lane.b32.xlu0 %v242, 126
        %v248 = vpop.permute.xlu0 %247
        %vm249 = vcmask 1031168
        %v250 = vsel %vm249, %v246, %v248
        %252 = vst [vmem:[#allocation3 + $0x10] sm:$0xff] %v250
        %v253 = vld [vmem:[#allocation2] sm:$0xff]
        %v254 = vld [vmem:[#allocation2 + $0x8] sm:$0xff]
        %257 = vrot.lane.b32.xlu0 %v253, 125
        %v258 = vpop.permute.xlu0 %257
        %259 = vrot.lane.b32.xlu0 %v254, 125
        %v260 = vpop.permute.xlu0 %259
        %vm261 = vcmask 1022976
        %v262 = vsel %vm261, %v258, %v260
        %264 = vst [vmem:[#allocation3 + $0x18] sm:$0xff] %v262
        %v265 = vld [vmem:[#allocation2] sm:$0xff]
        %v266 = vld [vmem:[#allocation2 + $0x8] sm:$0xff]
        %269 = vrot.lane.b32.xlu0 %v265, 124
        %v270 = vpop.permute.xlu0 %269
        %271 = vrot.lane.b32.xlu0 %v266, 124
        %v272 = vpop.permute.xlu0 %271
        %vm273 = vcmask 1014784
        %v274 = vsel %vm273, %v270, %v272
        %276 = vst [vmem:[#allocation3 + $0x20] sm:$0xff] %v274
        %v277 = vld [vmem:[#allocation2] sm:$0xff]
        %v278 = vld [vmem:[#allocation2 + $0x8] sm:$0xff]
        %281 = vrot.lane.b32.xlu0 %v277, 123
        %v282 = vpop.permute.xlu0 %281
        %283 = vrot.lane.b32.xlu0 %v278, 123
        %v284 = vpop.permute.xlu0 %283
        %vm285 = vcmask 1006592
        %v286 = vsel %vm285, %v282, %v284
        %288 = vst [vmem:[#allocation3 + $0x28] sm:$0xff] %v286
        %v289 = vld [vmem:[#allocation2] sm:$0xff]
        %v290 = vld [vmem:[#allocation2 + $0x8] sm:$0xff]
        %293 = vrot.lane.b32.xlu0 %v289, 122
        %v294 = vpop.permute.xlu0 %293
        %295 = vrot.lane.b32.xlu0 %v290, 122
        %v296 = vpop.permute.xlu0 %295
        %vm297 = vcmask 998400
        %v298 = vsel %vm297, %v294, %v296
        %300 = vst [vmem:[#allocation3 + $0x30] sm:$0xff] %v298
        %v301 = vld [vmem:[#allocation2] sm:$0xff]
        %v302 = vld [vmem:[#allocation2 + $0x8] sm:$0xff]
        %305 = vrot.lane.b32.xlu0 %v301, 121
        %v306 = vpop.permute.xlu0 %305
        %307 = vrot.lane.b32.xlu0 %v302, 121
        %v308 = vpop.permute.xlu0 %307
        %vm309 = vcmask 990208
        %v310 = vsel %vm309, %v306, %v308
        %312 = vst [vmem:[#allocation3 + $0x38] sm:$0xff] %v310
        %v313 = vld [vmem:[#allocation2] sm:$0xff]
        %v314 = vld [vmem:[#allocation2 + $0x8] sm:$0xff]
        %317 = vrot.lane.b32.xlu0 %v313, 120
        %v318 = vpop.permute.xlu0 %317
        %319 = vrot.lane.b32.xlu0 %v314, 120
        %v320 = vpop.permute.xlu0 %319
        %vm321 = vcmask 982016
        %v322 = vsel %vm321, %v318, %v320
        %324 = vst [vmem:[#allocation3 + $0x40] sm:$0xff] %v322
        %v325 = vld [vmem:[#allocation2] sm:$0xff]
        %v326 = vld [vmem:[#allocation2 + $0x8] sm:$0xff]
        %329 = vrot.lane.b32.xlu0 %v325, 119
        %v330 = vpop.permute.xlu0 %329
        %331 = vrot.lane.b32.xlu0 %v326, 119
        %v332 = vpop.permute.xlu0 %331
        %vm333 = vcmask 973824
        %v334 = vsel %vm333, %v330, %v332
        %336 = vst [vmem:[#allocation3 + $0x48] sm:$0xff] %v334
        %v337 = vld [vmem:[#allocation2] sm:$0xff]
        %v338 = vld [vmem:[#allocation2 + $0x8] sm:$0xff]
        %341 = vrot.lane.b32.xlu0 %v337, 118
        %v342 = vpop.permute.xlu0 %341
        %343 = vrot.lane.b32.xlu0 %v338, 118
        %v344 = vpop.permute.xlu0 %343
        %vm345 = vcmask 965632
        %v346 = vsel %vm345, %v342, %v344
        %348 = vst [vmem:[#allocation3 + $0x50] sm:$0xff] %v346
        %v349 = vld [vmem:[#allocation2] sm:$0xff]
        %v350 = vld [vmem:[#allocation2 + $0x8] sm:$0xff]
        %353 = vrot.lane.b32.xlu0 %v349, 117
        %v354 = vpop.permute.xlu0 %353
        %355 = vrot.lane.b32.xlu0 %v350, 117
        %v356 = vpop.permute.xlu0 %355
        %vm357 = vcmask 957440
        %v358 = vsel %vm357, %v354, %v356
        %360 = vst [vmem:[#allocation3 + $0x58] sm:$0xff] %v358
        %v361 = vld [vmem:[#allocation2] sm:$0xff]
        %v362 = vld [vmem:[#allocation2 + $0x8] sm:$0xff]
        %365 = vrot.lane.b32.xlu0 %v361, 116
        %v366 = vpop.permute.xlu0 %365
        %367 = vrot.lane.b32.xlu0 %v362, 116
        %v368 = vpop.permute.xlu0 %367
        %vm369 = vcmask 949248
        %v370 = vsel %vm369, %v366, %v368
        %372 = vst [vmem:[#allocation3 + $0x60] sm:$0xff] %v370
        %v373 = vld [vmem:[#allocation2] sm:$0xff]
        %v374 = vld [vmem:[#allocation2 + $0x8] sm:$0xff]
        %377 = vrot.lane.b32.xlu0 %v373, 115
        %v378 = vpop.permute.xlu0 %377
        %379 = vrot.lane.b32.xlu0 %v374, 115
        %v380 = vpop.permute.xlu0 %379
        %vm381 = vcmask 941056
        %v382 = vsel %vm381, %v378, %v380
        %384 = vst [vmem:[#allocation3 + $0x68] sm:$0xff] %v382
        %v385 = vld [vmem:[#allocation2] sm:$0xff]
        %v386 = vld [vmem:[#allocation2 + $0x8] sm:$0xff]
        %389 = vrot.lane.b32.xlu0 %v385, 114
        %v390 = vpop.permute.xlu0 %389
        %391 = vrot.lane.b32.xlu0 %v386, 114
        %v392 = vpop.permute.xlu0 %391
        %vm393 = vcmask 932864
        %v394 = vsel %vm393, %v390, %v392
        %396 = vst [vmem:[#allocation3 + $0x70] sm:$0xff] %v394
        %v397 = vld [vmem:[#allocation2] sm:$0xff]
        %v398 = vld [vmem:[#allocation2 + $0x8] sm:$0xff]
        %401 = vrot.lane.b32.xlu0 %v397, 113
        %v402 = vpop.permute.xlu0 %401
        %403 = vrot.lane.b32.xlu0 %v398, 113
        %v404 = vpop.permute.xlu0 %403
        %vm405 = vcmask 924672
        %v406 = vsel %vm405, %v402, %v404
        %408 = vst [vmem:[#allocation3 + $0x78] sm:$0xff] %v406
        %v409 = vld [vmem:[#allocation2] sm:$0xff]
        %v410 = vld [vmem:[#allocation2 + $0x8] sm:$0xff]
        %413 = vrot.lane.b32.xlu0 %v409, 112
        %v414 = vpop.permute.xlu0 %413
        %415 = vrot.lane.b32.xlu0 %v410, 112
        %v416 = vpop.permute.xlu0 %415
        %vm417 = vcmask 916480
        %v418 = vsel %vm417, %v414, %v416
        %420 = vst [vmem:[#allocation3 + $0x80] sm:$0xff] %v418
        %v421 = vld [vmem:[#allocation2] sm:$0xff]
        %v422 = vld [vmem:[#allocation2 + $0x8] sm:$0xff]
        %425 = vrot.lane.b32.xlu0 %v421, 111
        %v426 = vpop.permute.xlu0 %425
        %427 = vrot.lane.b32.xlu0 %v422, 111
        %v428 = vpop.permute.xlu0 %427
        %vm429 = vcmask 908288
        %v430 = vsel %vm429, %v426, %v428
        %432 = vst [vmem:[#allocation3 + $0x88] sm:$0xff] %v430
        %v433 = vld [vmem:[#allocation2] sm:$0xff]
        %v434 = vld [vmem:[#allocation2 + $0x8] sm:$0xff]
        %437 = vrot.lane.b32.xlu0 %v433, 110
        %v438 = vpop.permute.xlu0 %437
        %439 = vrot.lane.b32.xlu0 %v434, 110
        %v440 = vpop.permute.xlu0 %439
        %vm441 = vcmask 900096
        %v442 = vsel %vm441, %v438, %v440
        %444 = vst [vmem:[#allocation3 + $0x90] sm:$0xff] %v442
        %v445 = vld [vmem:[#allocation2] sm:$0xff]
        %v446 = vld [vmem:[#allocation2 + $0x8] sm:$0xff]
        %449 = vrot.lane.b32.xlu0 %v445, 109
        %v450 = vpop.permute.xlu0 %449
        %451 = vrot.lane.b32.xlu0 %v446, 109
        %v452 = vpop.permute.xlu0 %451
        %vm453 = vcmask 891904
        %v454 = vsel %vm453, %v450, %v452
        %456 = vst [vmem:[#allocation3 + $0x98] sm:$0xff] %v454
        %v457 = vld [vmem:[#allocation2] sm:$0xff]
        %v458 = vld [vmem:[#allocation2 + $0x8] sm:$0xff]
        %461 = vrot.lane.b32.xlu0 %v457, 108
        %v462 = vpop.permute.xlu0 %461
        %463 = vrot.lane.b32.xlu0 %v458, 108
        %v464 = vpop.permute.xlu0 %463
        %vm465 = vcmask 883712
        %v466 = vsel %vm465, %v462, %v464
        %468 = vst [vmem:[#allocation3 + $0xa0] sm:$0xff] %v466
        %v469 = vld [vmem:[#allocation2] sm:$0xff]
        %v470 = vld [vmem:[#allocation2 + $0x8] sm:$0xff]
        %473 = vrot.lane.b32.xlu0 %v469, 107
        %v474 = vpop.permute.xlu0 %473
        %475 = vrot.lane.b32.xlu0 %v470, 107
        %v476 = vpop.permute.xlu0 %475
        %vm477 = vcmask 875520
        %v478 = vsel %vm477, %v474, %v476
        %480 = vst [vmem:[#allocation3 + $0xa8] sm:$0xff] %v478
        %v481 = vld [vmem:[#allocation2] sm:$0xff]
        %v482 = vld [vmem:[#allocation2 + $0x8] sm:$0xff]
        %485 = vrot.lane.b32.xlu0 %v481, 106
        %v486 = vpop.permute.xlu0 %485
        %487 = vrot.lane.b32.xlu0 %v482, 106
        %v488 = vpop.permute.xlu0 %487
        %vm489 = vcmask 867328
        %v490 = vsel %vm489, %v486, %v488
        %492 = vst [vmem:[#allocation3 + $0xb0] sm:$0xff] %v490
        %v493 = vld [vmem:[#allocation2] sm:$0xff]
        %v494 = vld [vmem:[#allocation2 + $0x8] sm:$0xff]
        %497 = vrot.lane.b32.xlu0 %v493, 105
        %v498 = vpop.permute.xlu0 %497
        %499 = vrot.lane.b32.xlu0 %v494, 105
        %v500 = vpop.permute.xlu0 %499
        %vm501 = vcmask 859136
        %v502 = vsel %vm501, %v498, %v500
        %504 = vst [vmem:[#allocation3 + $0xb8] sm:$0xff] %v502
        %v505 = vld [vmem:[#allocation2] sm:$0xff]
        %v506 = vld [vmem:[#allocation2 + $0x8] sm:$0xff]
        %509 = vrot.lane.b32.xlu0 %v505, 104
        %v510 = vpop.permute.xlu0 %509
        %511 = vrot.lane.b32.xlu0 %v506, 104
        %v512 = vpop.permute.xlu0 %511
        %vm513 = vcmask 850944
        %v514 = vsel %vm513, %v510, %v512
        %516 = vst [vmem:[#allocation3 + $0xc0] sm:$0xff] %v514
        %v517 = vld [vmem:[#allocation2] sm:$0xff]
        %v518 = vld [vmem:[#allocation2 + $0x8] sm:$0xff]
        %521 = vrot.lane.b32.xlu0 %v517, 103
        %v522 = vpop.permute.xlu0 %521
        %523 = vrot.lane.b32.xlu0 %v518, 103
        %v524 = vpop.permute.xlu0 %523
        %vm525 = vcmask 842752
        %v526 = vsel %vm525, %v522, %v524
        %528 = vst [vmem:[#allocation3 + $0xc8] sm:$0xff] %v526
        %v529 = vld [vmem:[#allocation2] sm:$0xff]
        %v530 = vld [vmem:[#allocation2 + $0x8] sm:$0xff]
        %533 = vrot.lane.b32.xlu0 %v529, 102
        %v534 = vpop.permute.xlu0 %533
        %535 = vrot.lane.b32.xlu0 %v530, 102
        %v536 = vpop.permute.xlu0 %535
        %vm537 = vcmask 834560
        %v538 = vsel %vm537, %v534, %v536
        %540 = vst [vmem:[#allocation3 + $0xd0] sm:$0xff] %v538
        %v541 = vld [vmem:[#allocation2] sm:$0xff]
        %v542 = vld [vmem:[#allocation2 + $0x8] sm:$0xff]
        %545 = vrot.lane.b32.xlu0 %v541, 101
        %v546 = vpop.permute.xlu0 %545
        %547 = vrot.lane.b32.xlu0 %v542, 101
        %v548 = vpop.permute.xlu0 %547
        %vm549 = vcmask 826368
        %v550 = vsel %vm549, %v546, %v548
        %552 = vst [vmem:[#allocation3 + $0xd8] sm:$0xff] %v550
        %v553 = vld [vmem:[#allocation2] sm:$0xff]
        %v554 = vld [vmem:[#allocation2 + $0x8] sm:$0xff]
        %557 = vrot.lane.b32.xlu0 %v553, 100
        %v558 = vpop.permute.xlu0 %557
        %559 = vrot.lane.b32.xlu0 %v554, 100
        %v560 = vpop.permute.xlu0 %559
        %vm561 = vcmask 818176
        %v562 = vsel %vm561, %v558, %v560
        %564 = vst [vmem:[#allocation3 + $0xe0] sm:$0xff] %v562
        %v565 = vld [vmem:[#allocation2] sm:$0xff]
        %v566 = vld [vmem:[#allocation2 + $0x8] sm:$0xff]
        %569 = vrot.lane.b32.xlu0 %v565, 99
        %v570 = vpop.permute.xlu0 %569
        %571 = vrot.lane.b32.xlu0 %v566, 99
        %v572 = vpop.permute.xlu0 %571
        %vm573 = vcmask 809984
        %v574 = vsel %vm573, %v570, %v572
        %576 = vst [vmem:[#allocation3 + $0xe8] sm:$0xff] %v574
        %v577 = vld [vmem:[#allocation2] sm:$0xff]
        %v578 = vld [vmem:[#allocation2 + $0x8] sm:$0xff]
        %581 = vrot.lane.b32.xlu0 %v577, 98
        %v582 = vpop.permute.xlu0 %581
        %583 = vrot.lane.b32.xlu0 %v578, 98
        %v584 = vpop.permute.xlu0 %583
        %vm585 = vcmask 801792
        %v586 = vsel %vm585, %v582, %v584
        %588 = vst [vmem:[#allocation3 + $0xf0] sm:$0xff] %v586
        %v589 = vld [vmem:[#allocation2] sm:$0xff]
        %v590 = vld [vmem:[#allocation2 + $0x8] sm:$0xff]
        %593 = vrot.lane.b32.xlu0 %v589, 97
        %v594 = vpop.permute.xlu0 %593
        %595 = vrot.lane.b32.xlu0 %v590, 97
        %v596 = vpop.permute.xlu0 %595
        %vm597 = vcmask 793600
        %v598 = vsel %vm597, %v594, %v596
        %600 = vst [vmem:[#allocation3 + $0xf8] sm:$0xff] %v598
        %v601 = vld [vmem:[#allocation2] sm:$0xff]
        %v602 = vld [vmem:[#allocation2 + $0x8] sm:$0xff]
        %605 = vrot.lane.b32.xlu0 %v601, 96
        %v606 = vpop.permute.xlu0 %605
        %607 = vrot.lane.b32.xlu0 %v602, 96
        %v608 = vpop.permute.xlu0 %607
        %vm609 = vcmask 785408
        %v610 = vsel %vm609, %v606, %v608
        %612 = vst [vmem:[#allocation3 + $0x100] sm:$0xff] %v610
        %v613 = vld [vmem:[#allocation2] sm:$0xff]
        %v614 = vld [vmem:[#allocation2 + $0x8] sm:$0xff]
        %617 = vrot.lane.b32.xlu0 %v613, 95
        %v618 = vpop.permute.xlu0 %617
        %619 = vrot.lane.b32.xlu0 %v614, 95
        %v620 = vpop.permute.xlu0 %619
        %vm621 = vcmask 777216
        %v622 = vsel %vm621, %v618, %v620
        %624 = vst [vmem:[#allocation3 + $0x108] sm:$0xff] %v622
        %v625 = vld [vmem:[#allocation2] sm:$0xff]
        %v626 = vld [vmem:[#allocation2 + $0x8] sm:$0xff]
        %629 = vrot.lane.b32.xlu0 %v625, 94
        %v630 = vpop.permute.xlu0 %629
        %631 = vrot.lane.b32.xlu0 %v626, 94
        %v632 = vpop.permute.xlu0 %631
        %vm633 = vcmask 769024
        %v634 = vsel %vm633, %v630, %v632
        %636 = vst [vmem:[#allocation3 + $0x110] sm:$0xff] %v634
        %v637 = vld [vmem:[#allocation2] sm:$0xff]
        %v638 = vld [vmem:[#allocation2 + $0x8] sm:$0xff]
        %641 = vrot.lane.b32.xlu0 %v637, 93
        %v642 = vpop.permute.xlu0 %641
        %643 = vrot.lane.b32.xlu0 %v638, 93
        %v644 = vpop.permute.xlu0 %643
        %vm645 = vcmask 760832
        %v646 = vsel %vm645, %v642, %v644
        %648 = vst [vmem:[#allocation3 + $0x118] sm:$0xff] %v646
        %v649 = vld [vmem:[#allocation2] sm:$0xff]
        %v650 = vld [vmem:[#allocation2 + $0x8] sm:$0xff]
        %653 = vrot.lane.b32.xlu0 %v649, 92
        %v654 = vpop.permute.xlu0 %653
        %655 = vrot.lane.b32.xlu0 %v650, 92
        %v656 = vpop.permute.xlu0 %655
        %vm657 = vcmask 752640
        %v658 = vsel %vm657, %v654, %v656
        %660 = vst [vmem:[#allocation3 + $0x120] sm:$0xff] %v658
        %v661 = vld [vmem:[#allocation2] sm:$0xff]
        %v662 = vld [vmem:[#allocation2 + $0x8] sm:$0xff]
        %665 = vrot.lane.b32.xlu0 %v661, 91
        %v666 = vpop.permute.xlu0 %665
        %667 = vrot.lane.b32.xlu0 %v662, 91
        %v668 = vpop.permute.xlu0 %667
        %vm669 = vcmask 744448
        %v670 = vsel %vm669, %v666, %v668
        %672 = vst [vmem:[#allocation3 + $0x128] sm:$0xff] %v670
        %v673 = vld [vmem:[#allocation2] sm:$0xff]
        %v674 = vld [vmem:[#allocation2 + $0x8] sm:$0xff]
        %677 = vrot.lane.b32.xlu0 %v673, 90
        %v678 = vpop.permute.xlu0 %677
        %679 = vrot.lane.b32.xlu0 %v674, 90
        %v680 = vpop.permute.xlu0 %679
        %vm681 = vcmask 736256
        %v682 = vsel %vm681, %v678, %v680
        %684 = vst [vmem:[#allocation3 + $0x130] sm:$0xff] %v682
        %v685 = vld [vmem:[#allocation2] sm:$0xff]
        %v686 = vld [vmem:[#allocation2 + $0x8] sm:$0xff]
        %689 = vrot.lane.b32.xlu0 %v685, 89
        %v690 = vpop.permute.xlu0 %689
        %691 = vrot.lane.b32.xlu0 %v686, 89
        %v692 = vpop.permute.xlu0 %691
        %vm693 = vcmask 728064
        %v694 = vsel %vm693, %v690, %v692
        %696 = vst [vmem:[#allocation3 + $0x138] sm:$0xff] %v694
        %v697 = vld [vmem:[#allocation2] sm:$0xff]
        %v698 = vld [vmem:[#allocation2 + $0x8] sm:$0xff]
        %701 = vrot.lane.b32.xlu0 %v697, 88
        %v702 = vpop.permute.xlu0 %701
        %703 = vrot.lane.b32.xlu0 %v698, 88
        %v704 = vpop.permute.xlu0 %703
        %vm705 = vcmask 719872
        %v706 = vsel %vm705, %v702, %v704
        %708 = vst [vmem:[#allocation3 + $0x140] sm:$0xff] %v706
        %v709 = vlaneseq
        %v710 = vand.u32 %v709, 127
        %vm711 = vcmp.lt.s32.totalorder %v710, 0
        %v712 = vsub.s32 0, %v710
        %v713 = vsel %vm711, %v712, %v710
        %v714 = vshrl.u32 %v713, 7
        %v715 = vand.u32 %v713, 127
        %v716 = vsub.s32 0, %v715
        %v717 = vsel %vm711, %v716, %v715
        %vm718 = vcmp.ne.s32.totalorder %v717, 0
        %vm719 = vcmp.lt.s32.totalorder %v717, 0
        %vm720 = vmand %vm719, %vm718
        %v721 = vadd.s32 %v717, 128
        %v722 = vsel %vm720, %v721, %v717
        %v723 = vld [vmem:[#allocation2] sm:$0xff]
        %v724 = vld [vmem:[#allocation2 + $0x8] sm:$0xff]
        %vm725 = vcmp.eq.s32.totalorder %v722, 0
        %p727 = scmp.ne.f32.partialorder -3e+38, -3e+38
        %s728 = sshrl.u32 -3e+38, 16
        %s729 = sand.u32 %s728, 1
        %s730 = sadd.s32 32767, %s729
        %s731 = sadd.s32 -3e+38, %s730
        %s732 = sand.u32 %s731, 4294901760
        %s733 = scalar_select %p727, 2143289344, %s732
        %s735 = sshrl.u32 %s733, 16
        %v736 = vsel %vm725, 1, 0
        %vm737 = vcmp.eq.s32.totalorder %v736, 1
        %s738 = sshll.u32 %s735, 16
        %s739 = sor.u32 %s735, %s738
        %v740 = vstv %s739
        %vm742 = vmpackc.low %vm737, %vm737
        %v743 = vsel %vm742, 65537, 0
        %v744 = vlaneseq
        %v745 = vshrl.u32 %v744, 7
        %v746 = vsub.s32 0, %v745
        %v747 = vrot.slane %v743, %v746
        %748 = vrot.lane.b32.xlu0 %v747, 19
        %v749 = vpop.permute.xlu0 %748
        %vm750 = vcmp.ne.s16.totalorder %v749, 0
        %v751 = vsel %vm750, %v740, %v723
        %v752 = vsel %vm750, %v740, %v724
        %vm753 = vcmp.eq.s32.totalorder %v722, 63
        %v754 = vsel %vm753, 1, 0
        %vm755 = vcmp.eq.s32.totalorder %v754, 1
        %vm756 = vmpackc.low %vm755, %vm755
        %v757 = vsel %vm756, 65537, 0
        %v758 = vlaneseq
        %v759 = vshrl.u32 %v758, 7
        %v760 = vsub.s32 0, %v759
        %v761 = vrot.slane %v757, %v760
        %762 = vrot.lane.b32.xlu0 %v761, 21
        %v763 = vpop.permute.xlu0 %762
        %vm764 = vcmp.ne.s16.totalorder %v763, 0
        %v765 = vsel %vm764, %v740, %v723
        %v766 = vsel %vm764, %v740, %v724
        %769 = vrot.lane.b32.xlu0 %v765, 126
        %v770 = vpop.permute.xlu0 %769
        %771 = vrot.lane.b32.xlu0 %v766, 126
        %v772 = vpop.permute.xlu0 %771
        %v773 = vsel %vm249, %v770, %v772
        %v776 = vmax.bf16 %v751, %v773
        %v777 = vmax.bf16 %v752, %v772
        %780 = vrot.lane.b32.xlu0 %v776, 1
        %v781 = vpop.permute.xlu0 %780
        %782 = vrot.lane.b32.xlu0 %v777, 1
        %v783 = vpop.permute.xlu0 %782
        %vm784 = vcmask 7168
        %v785 = vsel %vm784, %v781, %v783
        %v788 = vmax.bf16 %v723, %v781
        %v789 = vmax.bf16 %v724, %v785
        %792 = vrot.lane.b32.xlu0 %v788, 108
        %v793 = vpop.permute.xlu0 %792
        %794 = vrot.lane.b32.xlu0 %v789, 108
        %v795 = vpop.permute.xlu0 %794
        %v796 = vsel %vm465, %v793, %v795
        %798 = vst [vmem:[#allocation3 + $0x148] sm:$0xff] %v796
        %v799 = vld [vmem:[%s1] sm:$0xff]
        %v800 = vld [vmem:[%s1 + $0x8] sm:$0xff]
        %v801 = vld [vmem:[%s1 + $0x10] sm:$0xff]
        %v802 = vld [vmem:[%s1 + $0x18] sm:$0xff]
        %v803 = vld [vmem:[%s1 + $0x20] sm:$0xff]
        %v804 = vld [vmem:[%s1 + $0x28] sm:$0xff]
        %v805 = vld [vmem:[%s1 + $0x30] sm:$0xff]
        %v806 = vld [vmem:[%s1 + $0x38] sm:$0xff]
        %v807 = vld [vmem:[%s1 + $0x40] sm:$0xff]
        %v808 = vld [vmem:[%s1 + $0x48] sm:$0xff]
        %v809 = vld [vmem:[%s1 + $0x50] sm:$0xff]
        %v810 = vld [vmem:[%s1 + $0x58] sm:$0xff]
        %v811 = vld [vmem:[%s1 + $0x60] sm:$0xff]
        %v812 = vld [vmem:[%s1 + $0x68] sm:$0xff]
        %v813 = vld [vmem:[%s1 + $0x70] sm:$0xff]
        %v814 = vld [vmem:[%s1 + $0x78] sm:$0xff]
        %v815 = vld [vmem:[%s1 + $0x80] sm:$0xff]
        %v816 = vld [vmem:[%s1 + $0x88] sm:$0xff]
        %v817 = vld [vmem:[%s1 + $0x90] sm:$0xff]
        %v818 = vld [vmem:[%s1 + $0x98] sm:$0xff]
        %v819 = vld [vmem:[%s1 + $0xa0] sm:$0xff]
        %v820 = vld [vmem:[%s1 + $0xa8] sm:$0xff]
        %v821 = vld [vmem:[%s1 + $0xb0] sm:$0xff]
        %v822 = vld [vmem:[%s1 + $0xb8] sm:$0xff]
        %v823 = vld [vmem:[%s1 + $0xc0] sm:$0xff]
        %v824 = vld [vmem:[%s1 + $0xc8] sm:$0xff]
        %v825 = vld [vmem:[%s1 + $0xd0] sm:$0xff]
        %v826 = vld [vmem:[%s1 + $0xd8] sm:$0xff]
        %v827 = vld [vmem:[%s1 + $0xe0] sm:$0xff]
        %v828 = vld [vmem:[%s1 + $0xe8] sm:$0xff]
        %v829 = vld [vmem:[%s1 + $0xf0] sm:$0xff]
        %v830 = vld [vmem:[%s1 + $0xf8] sm:$0xff]
        %v831 = vld [vmem:[%s1 + $0x100] sm:$0xff]
        %v832 = vld [vmem:[%s1 + $0x108] sm:$0xff]
        %v833 = vld [vmem:[%s1 + $0x110] sm:$0xff]
        %v834 = vld [vmem:[%s1 + $0x118] sm:$0xff]
        %v835 = vld [vmem:[%s1 + $0x120] sm:$0xff]
        %v836 = vld [vmem:[%s1 + $0x128] sm:$0xff]
        %v837 = vld [vmem:[%s1 + $0x130] sm:$0xff]
        %v838 = vld [vmem:[%s1 + $0x138] sm:$0xff]
        %v839 = vld [vmem:[%s1 + $0x140] sm:$0xff]
        %v840 = vld [vmem:[%s1 + $0x148] sm:$0xff]
        %v841 = vld [vmem:[%s1 + $0x150] sm:$0xff]
        %v842 = vld [vmem:[%s1 + $0x158] sm:$0xff]
        %v843 = vld [vmem:[%s1 + $0x160] sm:$0xff]
        %v844 = vld [vmem:[%s1 + $0x168] sm:$0xff]
        %v845 = vld [vmem:[%s1 + $0x170] sm:$0xff]
        %v846 = vld [vmem:[%s1 + $0x178] sm:$0xff]
        %v847 = vld [vmem:[#allocation3] sm:$0xff]
        %v848 = vld [vmem:[#allocation3 + $0x8] sm:$0xff]
        %v849 = vld [vmem:[#allocation3 + $0x10] sm:$0xff]
        %v850 = vld [vmem:[#allocation3 + $0x18] sm:$0xff]
        %v851 = vld [vmem:[#allocation3 + $0x20] sm:$0xff]
        %v852 = vld [vmem:[#allocation3 + $0x28] sm:$0xff]
        %v853 = vld [vmem:[#allocation3 + $0x30] sm:$0xff]
        %v854 = vld [vmem:[#allocation3 + $0x38] sm:$0xff]
        %v855 = vld [vmem:[#allocation3 + $0x40] sm:$0xff]
        %v856 = vld [vmem:[#allocation3 + $0x48] sm:$0xff]
        %v857 = vld [vmem:[#allocation3 + $0x50] sm:$0xff]
        %v858 = vld [vmem:[#allocation3 + $0x58] sm:$0xff]
        %v859 = vld [vmem:[#allocation3 + $0x60] sm:$0xff]
        %v860 = vld [vmem:[#allocation3 + $0x68] sm:$0xff]
        %v861 = vld [vmem:[#allocation3 + $0x70] sm:$0xff]
        %v862 = vld [vmem:[#allocation3 + $0x78] sm:$0xff]
        %v863 = vld [vmem:[#allocation3 + $0x80] sm:$0xff]
        %v864 = vld [vmem:[#allocation3 + $0x88] sm:$0xff]
        %v865 = vld [vmem:[#allocation3 + $0x90] sm:$0xff]
        %v866 = vld [vmem:[#allocation3 + $0x98] sm:$0xff]
        %v867 = vld [vmem:[#allocation3 + $0xa0] sm:$0xff]
        %v868 = vld [vmem:[#allocation3 + $0xa8] sm:$0xff]
        %v869 = vld [vmem:[#allocation3 + $0xb0] sm:$0xff]
        %v870 = vld [vmem:[#allocation3 + $0xb8] sm:$0xff]
        %v871 = vld [vmem:[#allocation3 + $0xc0] sm:$0xff]
        %v872 = vld [vmem:[#allocation3 + $0xc8] sm:$0xff]
        %v873 = vld [vmem:[#allocation3 + $0xd0] sm:$0xff]
        %v874 = vld [vmem:[#allocation3 + $0xd8] sm:$0xff]
        %v875 = vld [vmem:[#allocation3 + $0xe0] sm:$0xff]
        %v876 = vld [vmem:[#allocation3 + $0xe8] sm:$0xff]
        %v877 = vld [vmem:[#allocation3 + $0xf0] sm:$0xff]
        %v878 = vld [vmem:[#allocation3 + $0xf8] sm:$0xff]
        %v879 = vld [vmem:[#allocation3 + $0x100] sm:$0xff]
        %v880 = vld [vmem:[#allocation3 + $0x108] sm:$0xff]
        %v881 = vld [vmem:[#allocation3 + $0x110] sm:$0xff]
        %v882 = vld [vmem:[#allocation3 + $0x118] sm:$0xff]
        %v883 = vld [vmem:[#allocation3 + $0x120] sm:$0xff]
        %v884 = vld [vmem:[#allocation3 + $0x128] sm:$0xff]
        %v885 = vld [vmem:[#allocation3 + $0x130] sm:$0xff]
        %v886 = vld [vmem:[#allocation3 + $0x138] sm:$0xff]
        %v887 = vld [vmem:[#allocation3 + $0x140] sm:$0xff]
        %v888 = vld [vmem:[#allocation3 + $0x148] sm:$0xff]
        %v889 = vld [vmem:[%s2] sm:$0xff]
        %v890 = vld [vmem:[%s2 + $0x8] sm:$0xff]
        %v891 = vld [vmem:[%s2 + $0x10] sm:$0xff]
        %v892 = vld [vmem:[%s2 + $0x18] sm:$0xff]
        %v893 = vld [vmem:[%s2 + $0x20] sm:$0xff]
        %v894 = vld [vmem:[%s2 + $0x28] sm:$0xff]
        %v895 = vld [vmem:[%s2 + $0x30] sm:$0xff]
        %v896 = vld [vmem:[%s2 + $0x38] sm:$0xff]
        %v897 = vld [vmem:[%s2 + $0x40] sm:$0xff]
        %v898 = vld [vmem:[%s2 + $0x48] sm:$0xff]
        %v899 = vld [vmem:[%s2 + $0x50] sm:$0xff]
        %v900 = vld [vmem:[%s2 + $0x58] sm:$0xff]
        %v901 = vld [vmem:[%s2 + $0x60] sm:$0xff]
        %v902 = vld [vmem:[%s2 + $0x68] sm:$0xff]
        %v903 = vld [vmem:[%s2 + $0x70] sm:$0xff]
        %v904 = vld [vmem:[%s2 + $0x78] sm:$0xff]
        %906 = vset.pattern.permute.xlu0 0
        %907 = vperm.xlu0 %906, %v889
        %v908 = vpop.permute.xlu0 %907
        %911 = vset.pattern.permute.xlu0 0
        %912 = vperm.xlu0 %911, %v890
        %v913 = vpop.permute.xlu0 %912
        %916 = vset.pattern.permute.xlu0 0
        %917 = vperm.xlu0 %916, %v891
        %v918 = vpop.permute.xlu0 %917
        %921 = vset.pattern.permute.xlu0 0
        %922 = vperm.xlu0 %921, %v892
        %v923 = vpop.permute.xlu0 %922
        %926 = vset.pattern.permute.xlu0 0
        %927 = vperm.xlu0 %926, %v893
        %v928 = vpop.permute.xlu0 %927
        %931 = vset.pattern.permute.xlu0 0
        %932 = vperm.xlu0 %931, %v894
        %v933 = vpop.permute.xlu0 %932
        %936 = vset.pattern.permute.xlu0 0
        %937 = vperm.xlu0 %936, %v895
        %v938 = vpop.permute.xlu0 %937
        %941 = vset.pattern.permute.xlu0 0
        %942 = vperm.xlu0 %941, %v896
        %v943 = vpop.permute.xlu0 %942
        %946 = vset.pattern.permute.xlu0 0
        %947 = vperm.xlu0 %946, %v897
        %v948 = vpop.permute.xlu0 %947
        %951 = vset.pattern.permute.xlu0 0
        %952 = vperm.xlu0 %951, %v898
        %v953 = vpop.permute.xlu0 %952
        %956 = vset.pattern.permute.xlu0 0
        %957 = vperm.xlu0 %956, %v899
        %v958 = vpop.permute.xlu0 %957
        %961 = vset.pattern.permute.xlu0 0
        %962 = vperm.xlu0 %961, %v900
        %v963 = vpop.permute.xlu0 %962
        %966 = vset.pattern.permute.xlu0 0
        %967 = vperm.xlu0 %966, %v901
        %v968 = vpop.permute.xlu0 %967
        %971 = vset.pattern.permute.xlu0 0
        %972 = vperm.xlu0 %971, %v902
        %v973 = vpop.permute.xlu0 %972
        %976 = vset.pattern.permute.xlu0 0
        %977 = vperm.xlu0 %976, %v903
        %v978 = vpop.permute.xlu0 %977
        %981 = vset.pattern.permute.xlu0 0
        %982 = vperm.xlu0 %981, %v904
        %v983 = vpop.permute.xlu0 %982
        %v1033 = vunpack.c.l.b16 %v799
        %v1034 = vunpack.c.h.b16 %v799
        %v1035 = vunpack.c.l.b16 %v800
        %v1036 = vunpack.c.h.b16 %v800
        %v1037 = vunpack.c.l.b16 %v801
        %v1038 = vunpack.c.h.b16 %v801
        %v1039 = vunpack.c.l.b16 %v802
        %v1040 = vunpack.c.h.b16 %v802
        %v1041 = vunpack.c.l.b16 %v803
        %v1042 = vunpack.c.h.b16 %v803
        %v1043 = vunpack.c.l.b16 %v804
        %v1044 = vunpack.c.h.b16 %v804
        %v1045 = vunpack.c.l.b16 %v805
        %v1046 = vunpack.c.h.b16 %v805
        %v1047 = vunpack.c.l.b16 %v806
        %v1048 = vunpack.c.h.b16 %v806
        %v1049 = vunpack.c.l.b16 %v807
        %v1050 = vunpack.c.h.b16 %v807
        %v1051 = vunpack.c.l.b16 %v808
        %v1052 = vunpack.c.h.b16 %v808
        %v1053 = vunpack.c.l.b16 %v809
        %v1054 = vunpack.c.h.b16 %v809
        %v1055 = vunpack.c.l.b16 %v810
        %v1056 = vunpack.c.h.b16 %v810
        %v1057 = vunpack.c.l.b16 %v811
        %v1058 = vunpack.c.h.b16 %v811
        %v1059 = vunpack.c.l.b16 %v812
        %v1060 = vunpack.c.h.b16 %v812
        %v1061 = vunpack.c.l.b16 %v813
        %v1062 = vunpack.c.h.b16 %v813
        %v1063 = vunpack.c.l.b16 %v814
        %v1064 = vunpack.c.h.b16 %v814
        %v1065 = vunpack.c.l.b16 %v815
        %v1066 = vunpack.c.h.b16 %v815
        %v1067 = vunpack.c.l.b16 %v816
        %v1068 = vunpack.c.h.b16 %v816
        %v1069 = vunpack.c.l.b16 %v817
        %v1070 = vunpack.c.h.b16 %v817
        %v1071 = vunpack.c.l.b16 %v818
        %v1072 = vunpack.c.h.b16 %v818
        %v1073 = vunpack.c.l.b16 %v819
        %v1074 = vunpack.c.h.b16 %v819
        %v1075 = vunpack.c.l.b16 %v820
        %v1076 = vunpack.c.h.b16 %v820
        %v1077 = vunpack.c.l.b16 %v821
        %v1078 = vunpack.c.h.b16 %v821
        %v1079 = vunpack.c.l.b16 %v822
        %v1080 = vunpack.c.h.b16 %v822
        %v1081 = vunpack.c.l.b16 %v823
        %v1082 = vunpack.c.h.b16 %v823
        %v1083 = vunpack.c.l.b16 %v824
        %v1084 = vunpack.c.h.b16 %v824
        %v1085 = vunpack.c.l.b16 %v825
        %v1086 = vunpack.c.h.b16 %v825
        %v1087 = vunpack.c.l.b16 %v826
        %v1088 = vunpack.c.h.b16 %v826
        %v1089 = vunpack.c.l.b16 %v827
        %v1090 = vunpack.c.h.b16 %v827
        %v1091 = vunpack.c.l.b16 %v828
        %v1092 = vunpack.c.h.b16 %v828
        %v1093 = vunpack.c.l.b16 %v829
        %v1094 = vunpack.c.h.b16 %v829
        %v1095 = vunpack.c.l.b16 %v830
        %v1096 = vunpack.c.h.b16 %v830
        %v1097 = vunpack.c.l.b16 %v831
        %v1098 = vunpack.c.h.b16 %v831
        %v1099 = vunpack.c.l.b16 %v832
        %v1100 = vunpack.c.h.b16 %v832
        %v1101 = vunpack.c.l.b16 %v833
        %v1102 = vunpack.c.h.b16 %v833
        %v1103 = vunpack.c.l.b16 %v834
        %v1104 = vunpack.c.h.b16 %v834
        %v1105 = vunpack.c.l.b16 %v835
        %v1106 = vunpack.c.h.b16 %v835
        %v1107 = vunpack.c.l.b16 %v836
        %v1108 = vunpack.c.h.b16 %v836
        %v1109 = vunpack.c.l.b16 %v837
        %v1110 = vunpack.c.h.b16 %v837
        %v1111 = vunpack.c.l.b16 %v838
        %v1112 = vunpack.c.h.b16 %v838
        %v1113 = vunpack.c.l.b16 %v839
        %v1114 = vunpack.c.h.b16 %v839
        %v1115 = vunpack.c.l.b16 %v840
        %v1116 = vunpack.c.h.b16 %v840
        %v1117 = vunpack.c.l.b16 %v841
        %v1118 = vunpack.c.h.b16 %v841
        %v1119 = vunpack.c.l.b16 %v842
        %v1120 = vunpack.c.h.b16 %v842
        %v1121 = vunpack.c.l.b16 %v843
        %v1122 = vunpack.c.h.b16 %v843
        %v1123 = vunpack.c.l.b16 %v844
        %v1124 = vunpack.c.h.b16 %v844
        %v1125 = vunpack.c.l.b16 %v845
        %v1126 = vunpack.c.h.b16 %v845
        %v1127 = vunpack.c.l.b16 %v846
        %v1128 = vunpack.c.h.b16 %v846
        %v1129 = vpack.c.b16 %v1039, %v1033
        %v1130 = vpack.c.b16 %v1040, %v1034
        %v1131 = vpack.c.b16 %v1041, %v1035
        %v1132 = vpack.c.b16 %v1042, %v1036
        %v1133 = vpack.c.b16 %v1043, %v1037
        %v1134 = vpack.c.b16 %v1044, %v1038
        %v1135 = vpack.c.b16 %v1051, %v1045
        %v1136 = vpack.c.b16 %v1052, %v1046
        %v1137 = vpack.c.b16 %v1053, %v1047
        %v1138 = vpack.c.b16 %v1054, %v1048
        %v1139 = vpack.c.b16 %v1055, %v1049
        %v1140 = vpack.c.b16 %v1056, %v1050
        %v1141 = vpack.c.b16 %v1063, %v1057
        %v1142 = vpack.c.b16 %v1064, %v1058
        %v1143 = vpack.c.b16 %v1065, %v1059
        %v1144 = vpack.c.b16 %v1066, %v1060
        %v1145 = vpack.c.b16 %v1067, %v1061
        %v1146 = vpack.c.b16 %v1068, %v1062
        %v1147 = vpack.c.b16 %v1075, %v1069
        %v1148 = vpack.c.b16 %v1076, %v1070
        %v1149 = vpack.c.b16 %v1077, %v1071
        %v1150 = vpack.c.b16 %v1078, %v1072
        %v1151 = vpack.c.b16 %v1079, %v1073
        %v1152 = vpack.c.b16 %v1080, %v1074
        %v1153 = vpack.c.b16 %v1087, %v1081
        %v1154 = vpack.c.b16 %v1088, %v1082
        %v1155 = vpack.c.b16 %v1089, %v1083
        %v1156 = vpack.c.b16 %v1090, %v1084
        %v1157 = vpack.c.b16 %v1091, %v1085
        %v1158 = vpack.c.b16 %v1092, %v1086
        %v1159 = vpack.c.b16 %v1099, %v1093
        %v1160 = vpack.c.b16 %v1100, %v1094
        %v1161 = vpack.c.b16 %v1101, %v1095
        %v1162 = vpack.c.b16 %v1102, %v1096
        %v1163 = vpack.c.b16 %v1103, %v1097
        %v1164 = vpack.c.b16 %v1104, %v1098
        %v1165 = vpack.c.b16 %v1111, %v1105
        %v1166 = vpack.c.b16 %v1112, %v1106
        %v1167 = vpack.c.b16 %v1113, %v1107
        %v1168 = vpack.c.b16 %v1114, %v1108
        %v1169 = vpack.c.b16 %v1115, %v1109
        %v1170 = vpack.c.b16 %v1116, %v1110
        %v1171 = vpack.c.b16 %v1123, %v1117
        %v1172 = vpack.c.b16 %v1124, %v1118
        %v1173 = vpack.c.b16 %v1125, %v1119
        %v1174 = vpack.c.b16 %v1126, %v1120
        %v1175 = vpack.c.b16 %v1127, %v1121
        %v1176 = vpack.c.b16 %v1128, %v1122
        %vm1217 = vcmask 261120
        %v1219 = vsel %vm1217, %v1134, 0
        %v1222 = vsel %vm1217, %v1140, 0
        %v1225 = vsel %vm1217, %v1146, 0
        %v1228 = vsel %vm1217, %v1152, 0
        %v1231 = vsel %vm1217, %v1158, 0
        %v1234 = vsel %vm1217, %v1164, 0
        %v1237 = vsel %vm1217, %v1170, 0
        %v1240 = vsel %vm1217, %v1176, 0
        %1242 = vmatprep.subr.bf16.mxu0 0
        %1243 = vmatpush1.bf16.msra.mxu0 %v847
        %1244 = vmatprep.subr.bf16.mxu0 0
        %1245 = vmatpush1.bf16.msra.mxu0 %v848
        %1246 = vmatprep.subr.bf16.mxu0 0
        %1247 = vmatpush1.bf16.msra.mxu0 %v849
        %1248 = vmatprep.subr.bf16.mxu0 0
        %1249 = vmatpush1.bf16.msra.mxu0 %v850
        %1250 = vmatprep.subr.bf16.mxu0 0
        %1251 = vmatpush1.bf16.msra.mxu0 %v851
        %1252 = vmatprep.subr.bf16.mxu0 0
        %1253 = vmatpush1.bf16.msra.mxu0 %v852
        %1254 = vmatprep.subr.bf16.mxu0 0
        %1255 = vmatpush1.bf16.msra.mxu0 %v853
        %1256 = vmatprep.subr.bf16.mxu0 0
        %1257 = vmatpush1.bf16.msra.mxu0 %v854
        %1258 = vmatprep.subr.bf16.mxu0 0
        %1259 = vmatpush1.bf16.msra.mxu0 %v855
        %1260 = vmatprep.subr.bf16.mxu0 0
        %1261 = vmatpush1.bf16.msra.mxu0 %v856
        %1262 = vmatprep.subr.bf16.mxu0 0
        %1263 = vmatpush1.bf16.msra.mxu0 %v857
        %1264 = vmatprep.subr.bf16.mxu0 0
        %1265 = vmatpush1.bf16.msra.mxu0 %v858
        %1266 = vmatprep.subr.bf16.mxu0 0
        %1267 = vmatpush1.bf16.msra.mxu0 %v859
        %1268 = vmatprep.subr.bf16.mxu0 0
        %1269 = vmatpush1.bf16.msra.mxu0 %v860
        %1270 = vmatprep.subr.bf16.mxu0 0
        %1271 = vmatpush1.bf16.msra.mxu0 %v861
        %1272 = vmatprep.subr.bf16.mxu0 0
        %1273 = vmatpush1.bf16.msra.mxu0 %v862
        %1274 = vmatprep.mubr.bf16.mxu0 %v1130
        %1275 = vmatmul.mubr.bf16.gmra.mrb[0].mxu0 %v1129
        %v1276 = vpop.f32.mrb[0].mxu0
        %v1277 = vadd.f32 %v908, %v1276
        %v1278 = vpop.f32.mrb[0].mxu0
        %v1279 = vpop.f32.mrb[0].mxu0
        %v1280 = vadd.f32 %v913, %v1279
        %v1281 = vpop.f32.mrb[0].mxu0
        %1282 = vmatprep.mubr.bf16.mxu0 %v1136
        %1283 = vmatmul.mubr.bf16.gmra.mrb[0].mxu0 %v1135
        %v1284 = vpop.f32.mrb[0].mxu0
        %v1285 = vadd.f32 %v918, %v1284
        %v1286 = vpop.f32.mrb[0].mxu0
        %v1287 = vpop.f32.mrb[0].mxu0
        %v1288 = vadd.f32 %v923, %v1287
        %v1289 = vpop.f32.mrb[0].mxu0
        %1290 = vmatprep.mubr.bf16.mxu0 %v1142
        %1291 = vmatmul.mubr.bf16.gmra.mrb[0].mxu0 %v1141
        %v1292 = vpop.f32.mrb[0].mxu0
        %v1293 = vadd.f32 %v928, %v1292
        %v1294 = vpop.f32.mrb[0].mxu0
        %v1295 = vpop.f32.mrb[0].mxu0
        %v1296 = vadd.f32 %v933, %v1295
        %v1297 = vpop.f32.mrb[0].mxu0
        %1298 = vmatprep.mubr.bf16.mxu0 %v1148
        %1299 = vmatmul.mubr.bf16.gmra.mrb[0].mxu0 %v1147
        %v1300 = vpop.f32.mrb[0].mxu0
        %v1301 = vadd.f32 %v938, %v1300
        %v1302 = vpop.f32.mrb[0].mxu0
        %v1303 = vpop.f32.mrb[0].mxu0
        %v1304 = vadd.f32 %v943, %v1303
        %v1305 = vpop.f32.mrb[0].mxu0
        %1306 = vmatprep.mubr.bf16.mxu0 %v1154
        %1307 = vmatmul.mubr.bf16.gmra.mrb[0].mxu0 %v1153
        %v1308 = vpop.f32.mrb[0].mxu0
        %v1309 = vadd.f32 %v948, %v1308
        %v1310 = vpop.f32.mrb[0].mxu0
        %v1311 = vpop.f32.mrb[0].mxu0
        %v1312 = vadd.f32 %v953, %v1311
        %v1313 = vpop.f32.mrb[0].mxu0
        %1314 = vmatprep.mubr.bf16.mxu0 %v1160
        %1315 = vmatmul.mubr.bf16.gmra.mrb[0].mxu0 %v1159
        %v1316 = vpop.f32.mrb[0].mxu0
        %v1317 = vadd.f32 %v958, %v1316
        %v1318 = vpop.f32.mrb[0].mxu0
        %v1319 = vpop.f32.mrb[0].mxu0
        %v1320 = vadd.f32 %v963, %v1319
        %v1321 = vpop.f32.mrb[0].mxu0
        %1322 = vmatprep.mubr.bf16.mxu0 %v1166
        %1323 = vmatmul.mubr.bf16.gmra.mrb[0].mxu0 %v1165
        %v1324 = vpop.f32.mrb[0].mxu0
        %v1325 = vadd.f32 %v968, %v1324
        %v1326 = vpop.f32.mrb[0].mxu0
        %v1327 = vpop.f32.mrb[0].mxu0
        %v1328 = vadd.f32 %v973, %v1327
        %v1329 = vpop.f32.mrb[0].mxu0
        %1330 = vmatprep.mubr.bf16.mxu0 %v1172
        %1331 = vmatmul.mubr.bf16.gmra.mrb[0].mxu0 %v1171
        %v1332 = vpop.f32.mrb[0].mxu0
        %v1333 = vadd.f32 %v978, %v1332
        %v1334 = vpop.f32.mrb[0].mxu0
        %v1335 = vpop.f32.mrb[0].mxu0
        %v1336 = vadd.f32 %v983, %v1335
        %v1337 = vpop.f32.mrb[0].mxu0
        %1338 = vdwg.mxu0
        %1339 = vmatprep.subr.bf16.mxu0 0
        %1340 = vmatpush1.bf16.msra.mxu0 %v863
        %1341 = vmatprep.subr.bf16.mxu0 0
        %1342 = vmatpush1.bf16.msra.mxu0 %v864
        %1343 = vmatprep.subr.bf16.mxu0 0
        %1344 = vmatpush1.bf16.msra.mxu0 %v865
        %1345 = vmatprep.subr.bf16.mxu0 0
        %1346 = vmatpush1.bf16.msra.mxu0 %v866
        %1347 = vmatprep.subr.bf16.mxu0 0
        %1348 = vmatpush1.bf16.msra.mxu0 %v867
        %1349 = vmatprep.subr.bf16.mxu0 0
        %1350 = vmatpush1.bf16.msra.mxu0 %v868
        %1351 = vmatprep.subr.bf16.mxu0 0
        %1352 = vmatpush1.bf16.msra.mxu0 %v869
        %1353 = vmatprep.subr.bf16.mxu0 0
        %1354 = vmatpush1.bf16.msra.mxu0 %v870
        %1355 = vmatprep.subr.bf16.mxu0 0
        %1356 = vmatpush1.bf16.msra.mxu0 %v871
        %1357 = vmatprep.subr.bf16.mxu0 0
        %1358 = vmatpush1.bf16.msra.mxu0 %v872
        %1359 = vmatprep.subr.bf16.mxu0 0
        %1360 = vmatpush1.bf16.msra.mxu0 %v873
        %1361 = vmatprep.subr.bf16.mxu0 0
        %1362 = vmatpush1.bf16.msra.mxu0 %v874
        %1363 = vmatprep.subr.bf16.mxu0 0
        %1364 = vmatpush1.bf16.msra.mxu0 %v875
        %1365 = vmatprep.subr.bf16.mxu0 0
        %1366 = vmatpush1.bf16.msra.mxu0 %v876
        %1367 = vmatprep.subr.bf16.mxu0 0
        %1368 = vmatpush1.bf16.msra.mxu0 %v877
        %1369 = vmatprep.subr.bf16.mxu0 0
        %1370 = vmatpush1.bf16.msra.mxu0 %v878
        %1371 = vmatprep.mubr.bf16.mxu0 %v1132
        %1372 = vmatmul.mubr.bf16.gmra.mrb[0].mxu0 %v1131
        %v1373 = vpop.f32.mrb[0].mxu0
        %v1374 = vadd.f32 %v1277, %v1373
        %v1375 = vpop.f32.mrb[0].mxu0
        %v1376 = vpop.f32.mrb[0].mxu0
        %v1377 = vadd.f32 %v1280, %v1376
        %v1378 = vpop.f32.mrb[0].mxu0
        %1379 = vmatprep.mubr.bf16.mxu0 %v1138
        %1380 = vmatmul.mubr.bf16.gmra.mrb[0].mxu0 %v1137
        %v1381 = vpop.f32.mrb[0].mxu0
        %v1382 = vadd.f32 %v1285, %v1381
        %v1383 = vpop.f32.mrb[0].mxu0
        %v1384 = vpop.f32.mrb[0].mxu0
        %v1385 = vadd.f32 %v1288, %v1384
        %v1386 = vpop.f32.mrb[0].mxu0
        %1387 = vmatprep.mubr.bf16.mxu0 %v1144
        %1388 = vmatmul.mubr.bf16.gmra.mrb[0].mxu0 %v1143
        %v1389 = vpop.f32.mrb[0].mxu0
        %v1390 = vadd.f32 %v1293, %v1389
        %v1391 = vpop.f32.mrb[0].mxu0
        %v1392 = vpop.f32.mrb[0].mxu0
        %v1393 = vadd.f32 %v1296, %v1392
        %v1394 = vpop.f32.mrb[0].mxu0
        %1395 = vmatprep.mubr.bf16.mxu0 %v1150
        %1396 = vmatmul.mubr.bf16.gmra.mrb[0].mxu0 %v1149
        %v1397 = vpop.f32.mrb[0].mxu0
        %v1398 = vadd.f32 %v1301, %v1397
        %v1399 = vpop.f32.mrb[0].mxu0
        %v1400 = vpop.f32.mrb[0].mxu0
        %v1401 = vadd.f32 %v1304, %v1400
        %v1402 = vpop.f32.mrb[0].mxu0
        %1403 = vmatprep.mubr.bf16.mxu0 %v1156
        %1404 = vmatmul.mubr.bf16.gmra.mrb[0].mxu0 %v1155
        %v1405 = vpop.f32.mrb[0].mxu0
        %v1406 = vadd.f32 %v1309, %v1405
        %v1407 = vpop.f32.mrb[0].mxu0
        %v1408 = vpop.f32.mrb[0].mxu0
        %v1409 = vadd.f32 %v1312, %v1408
        %v1410 = vpop.f32.mrb[0].mxu0
        %1411 = vmatprep.mubr.bf16.mxu0 %v1162
        %1412 = vmatmul.mubr.bf16.gmra.mrb[0].mxu0 %v1161
        %v1413 = vpop.f32.mrb[0].mxu0
        %v1414 = vadd.f32 %v1317, %v1413
        %v1415 = vpop.f32.mrb[0].mxu0
        %v1416 = vpop.f32.mrb[0].mxu0
        %v1417 = vadd.f32 %v1320, %v1416
        %v1418 = vpop.f32.mrb[0].mxu0
        %1419 = vmatprep.mubr.bf16.mxu0 %v1168
        %1420 = vmatmul.mubr.bf16.gmra.mrb[0].mxu0 %v1167
        %v1421 = vpop.f32.mrb[0].mxu0
        %v1422 = vadd.f32 %v1325, %v1421
        %v1423 = vpop.f32.mrb[0].mxu0
        %v1424 = vpop.f32.mrb[0].mxu0
        %v1425 = vadd.f32 %v1328, %v1424
        %v1426 = vpop.f32.mrb[0].mxu0
        %1427 = vmatprep.mubr.bf16.mxu0 %v1174
        %1428 = vmatmul.mubr.bf16.gmra.mrb[0].mxu0 %v1173
        %v1429 = vpop.f32.mrb[0].mxu0
        %v1430 = vadd.f32 %v1333, %v1429
        %v1431 = vpop.f32.mrb[0].mxu0
        %v1432 = vpop.f32.mrb[0].mxu0
        %v1433 = vadd.f32 %v1336, %v1432
        %v1434 = vpop.f32.mrb[0].mxu0
        %1435 = vdwg.mxu0
        %1436 = vmatprep.subr.bf16.mxu0 0
        %1437 = vmatpush1.bf16.msra.mxu0 %v879
        %1438 = vmatprep.subr.bf16.mxu0 0
        %1439 = vmatpush1.bf16.msra.mxu0 %v880
        %1440 = vmatprep.subr.bf16.mxu0 0
        %1441 = vmatpush1.bf16.msra.mxu0 %v881
        %1442 = vmatprep.subr.bf16.mxu0 0
        %1443 = vmatpush1.bf16.msra.mxu0 %v882
        %1444 = vmatprep.subr.bf16.mxu0 0
        %1445 = vmatpush1.bf16.msra.mxu0 %v883
        %1446 = vmatprep.subr.bf16.mxu0 0
        %1447 = vmatpush1.bf16.msra.mxu0 %v884
        %1448 = vmatprep.subr.bf16.mxu0 0
        %1449 = vmatpush1.bf16.msra.mxu0 %v885
        %1450 = vmatprep.subr.bf16.mxu0 0
        %1451 = vmatpush1.bf16.msra.mxu0 %v886
        %1452 = vmatprep.subr.bf16.mxu0 0
        %1453 = vmatpush1.bf16.msra.mxu0 %v887
        %1454 = vmatprep.subr.bf16.mxu0 0
        %1455 = vmatpush1.bf16.msra.mxu0 %v888
        %1456 = vmatprep.subr.bf16.mxu0 0
        %1457 = vmatpush1.bf16.msra.mxu0 0
        %1458 = vmatprep.subr.bf16.mxu0 0
        %1459 = vmatpush1.bf16.msra.mxu0 0
        %1460 = vmatprep.subr.bf16.mxu0 0
        %1461 = vmatpush1.bf16.msra.mxu0 0
        %1462 = vmatprep.subr.bf16.mxu0 0
        %1463 = vmatpush1.bf16.msra.mxu0 0
        %1464 = vmatprep.subr.bf16.mxu0 0
        %1465 = vmatpush1.bf16.msra.mxu0 0
        %1466 = vmatprep.subr.bf16.mxu0 0
        %1467 = vmatpush1.bf16.msra.mxu0 0
        %1468 = vmatprep.mubr.bf16.mxu0 %v1219
        %1469 = vmatmul.mubr.bf16.gmra.mrb[0].mxu0 %v1133
        %v1470 = vpop.f32.mrb[0].mxu0
        %v1471 = vadd.f32 %v1374, %v1470
        %v1472 = vpop.f32.mrb[0].mxu0
        %v1473 = vpop.f32.mrb[0].mxu0
        %v1474 = vadd.f32 %v1377, %v1473
        %v1475 = vpop.f32.mrb[0].mxu0
        %1476 = vmatprep.mubr.bf16.mxu0 %v1222
        %1477 = vmatmul.mubr.bf16.gmra.mrb[0].mxu0 %v1139
        %v1478 = vpop.f32.mrb[0].mxu0
        %v1479 = vadd.f32 %v1382, %v1478
        %v1480 = vpop.f32.mrb[0].mxu0
        %v1481 = vpop.f32.mrb[0].mxu0
        %v1482 = vadd.f32 %v1385, %v1481
        %v1483 = vpop.f32.mrb[0].mxu0
        %1484 = vmatprep.mubr.bf16.mxu0 %v1225
        %1485 = vmatmul.mubr.bf16.gmra.mrb[0].mxu0 %v1145
        %v1486 = vpop.f32.mrb[0].mxu0
        %v1487 = vadd.f32 %v1390, %v1486
        %v1488 = vpop.f32.mrb[0].mxu0
        %v1489 = vpop.f32.mrb[0].mxu0
        %v1490 = vadd.f32 %v1393, %v1489
        %v1491 = vpop.f32.mrb[0].mxu0
        %1492 = vmatprep.mubr.bf16.mxu0 %v1228
        %1493 = vmatmul.mubr.bf16.gmra.mrb[0].mxu0 %v1151
        %v1494 = vpop.f32.mrb[0].mxu0
        %v1495 = vadd.f32 %v1398, %v1494
        %v1496 = vpop.f32.mrb[0].mxu0
        %v1497 = vpop.f32.mrb[0].mxu0
        %v1498 = vadd.f32 %v1401, %v1497
        %v1499 = vpop.f32.mrb[0].mxu0
        %1500 = vmatprep.mubr.bf16.mxu0 %v1231
        %1501 = vmatmul.mubr.bf16.gmra.mrb[0].mxu0 %v1157
        %v1502 = vpop.f32.mrb[0].mxu0
        %v1503 = vadd.f32 %v1406, %v1502
        %v1504 = vpop.f32.mrb[0].mxu0
        %v1505 = vpop.f32.mrb[0].mxu0
        %v1506 = vadd.f32 %v1409, %v1505
        %v1507 = vpop.f32.mrb[0].mxu0
        %1508 = vmatprep.mubr.bf16.mxu0 %v1234
        %1509 = vmatmul.mubr.bf16.gmra.mrb[0].mxu0 %v1163
        %v1510 = vpop.f32.mrb[0].mxu0
        %v1511 = vadd.f32 %v1414, %v1510
        %v1512 = vpop.f32.mrb[0].mxu0
        %v1513 = vpop.f32.mrb[0].mxu0
        %v1514 = vadd.f32 %v1417, %v1513
        %v1515 = vpop.f32.mrb[0].mxu0
        %1516 = vmatprep.mubr.bf16.mxu0 %v1237
        %1517 = vmatmul.mubr.bf16.gmra.mrb[0].mxu0 %v1169
        %v1518 = vpop.f32.mrb[0].mxu0
        %v1519 = vadd.f32 %v1422, %v1518
        %v1520 = vpop.f32.mrb[0].mxu0
        %v1521 = vpop.f32.mrb[0].mxu0
        %v1522 = vadd.f32 %v1425, %v1521
        %v1523 = vpop.f32.mrb[0].mxu0
        %1524 = vmatprep.mubr.bf16.mxu0 %v1240
        %1525 = vmatmul.mubr.bf16.gmra.mrb[0].mxu0 %v1175
        %v1526 = vpop.f32.mrb[0].mxu0
        %v1527 = vadd.f32 %v1430, %v1526
        %v1528 = vpop.f32.mrb[0].mxu0
        %v1529 = vpop.f32.mrb[0].mxu0
        %v1530 = vadd.f32 %v1433, %v1529
        %v1531 = vpop.f32.mrb[0].mxu0
        %1532 = vdwg.mxu0
        %v1533 = vmax.f32 %v1471, 0.0
        %v1534 = vmax.f32 %v1474, 0.0
        %v1535 = vmax.f32 %v1479, 0.0
        %v1536 = vmax.f32 %v1482, 0.0
        %v1537 = vmax.f32 %v1487, 0.0
        %v1538 = vmax.f32 %v1490, 0.0
        %v1539 = vmax.f32 %v1495, 0.0
        %v1540 = vmax.f32 %v1498, 0.0
        %v1541 = vmax.f32 %v1503, 0.0
        %v1542 = vmax.f32 %v1506, 0.0
        %v1543 = vmax.f32 %v1511, 0.0
        %v1544 = vmax.f32 %v1514, 0.0
        %v1545 = vmax.f32 %v1519, 0.0
        %v1546 = vmax.f32 %v1522, 0.0
        %v1547 = vmax.f32 %v1527, 0.0
        %v1548 = vmax.f32 %v1530, 0.0
        %1549 = vst [vmem:[%s213] sm:$0xff] %v1533
        %1550 = vst [vmem:[%s213 + $0x8] sm:$0xff] %v1534
        %1551 = vst [vmem:[%s213 + $0x10] sm:$0xff] %v1535
        %1552 = vst [vmem:[%s213 + $0x18] sm:$0xff] %v1536
        %1553 = vst [vmem:[%s213 + $0x20] sm:$0xff] %v1537
        %1554 = vst [vmem:[%s213 + $0x28] sm:$0xff] %v1538
        %1555 = vst [vmem:[%s213 + $0x30] sm:$0xff] %v1539
        %1556 = vst [vmem:[%s213 + $0x38] sm:$0xff] %v1540
        %1557 = vst [vmem:[%s213 + $0x40] sm:$0xff] %v1541
        %1558 = vst [vmem:[%s213 + $0x48] sm:$0xff] %v1542
        %1559 = vst [vmem:[%s213 + $0x50] sm:$0xff] %v1543
        %1560 = vst [vmem:[%s213 + $0x58] sm:$0xff] %v1544
        %1561 = vst [vmem:[%s213 + $0x60] sm:$0xff] %v1545
        %1562 = vst [vmem:[%s213 + $0x68] sm:$0xff] %v1546
        %1563 = vst [vmem:[%s213 + $0x70] sm:$0xff] %v1547
        %1564 = vst [vmem:[%s213 + $0x78] sm:$0xff] %v1548
        %s1565 = sand.u32 %s93, 1
        %s1566 = scalar_lea.sflag [#allocation6], %s1565
        %s1567 = sand.u32 %s93, 1
        %s1568 = smul.addr %s1567, 128
        %s1569 = scalar_lea.vmem [#allocation5], %s1568
        // Predicated region
        $region74: #{tpu_custom_call.1} parent=68 // pred_check
          %p1570 = pneg %p103
        $region75: #{tpu_custom_call.1} parent=68 // pred_check_branch
          %1572 = sbr.rel (%p1570) target = $region77
        $region76: #{tpu_custom_call.1} parent=68 // pred_region
          %s1574 = ssub.s32 2048, 2048
          %1575 = vsyncadd %s1566, %s1574
          %s1576 = smul.addr %s17, 16
          %s1577 = smul.addr %s1576, 128
          %s1578 = scalar_lea.hbm %s3, %s1577
          %s1579 = sshll.u32 %s1569, 4
          %s1580 = int_to_ptr.vmem [resolvable:$true] %s1579
          %1585 = dma.vmem_to_hbm [thread:$0]  %s1580, 2048, %s1578, %s1566, 128, 128, 8
        $region77: #{tpu_custom_call.1} parent=68 // pred_fallthru
          _
      $region69: #{tpu_custom_call.1} parent=5 // pred_fallthru
        _
      %p1586 = scmp.le.s32.totalorder 2, %s12
      // Predicated region
      $region78: #{tpu_custom_call.1} parent=5 // pred_check
        %p1587 = pneg %p1586
      $region79: #{tpu_custom_call.1} parent=5 // pred_check_branch
        %1589 = sbr.rel (%p1587) target = $region81
      $region80: #{tpu_custom_call.1} parent=5 // pred_region
        %s1590 = ssub.s32 %s12, 2
        // Predicated region
        $region82: #{tpu_custom_call.1} parent=80 // pred_check
          %p1591 = pneg %p109
        $region83: #{tpu_custom_call.1} parent=80 // pred_check_branch
          %1593 = sbr.rel (%p1591) target = $region85
        $region84: #{tpu_custom_call.1} parent=80 // pred_region
          %s1594 = sand.u32 %s94, 1
          %s1595 = scalar_lea.sflag [#allocation6], %s1594
          %s1596 = sand.u32 %s94, 1
          %s1597 = smul.addr %s1596, 128
          %s1598 = scalar_lea.vmem [#allocation5], %s1597
          %1599 = dma.done %s1595, 2048
        $region85: #{tpu_custom_call.1} parent=80 // pred_fallthru
          _
      $region81: #{tpu_custom_call.1} parent=5 // pred_fallthru
        _
    $region6: #{tpu_custom_call.1} parent=1 // loop_footer
      %s16 = sadd.s32 1, %s12
    $region7: #{tpu_custom_call.1} parent=1 // loop_footer_branch
      %11 = sbr.rel target = $region3
    $region8: #{tpu_custom_call.1} parent=1 // loop_exit
      _
    %1600 = vsyncpa [#allocation6], 1
    %s1601 = scalar_lea.sflag [#allocation6], 1
    %1602 = vsyncpa %s1601, 1

</llo_original>
